<compile_context>
chip_gen: v5e
topology: v5e:2x2
jax: 0.10.0
libtpu: 0.0.40
codegen_flags: <defaults>
</compile_context>

<pallas_src>
import functools

import jax
import jax.numpy as jnp
from jax.experimental import pallas as pl
from jax.experimental.pallas import tpu as pltpu


# ---------------------------------------------------------------------------
# small helpers
# ---------------------------------------------------------------------------
def _round_up(x, m):
    return (x + m - 1) // m * m


def _row_tile(m, cap=512):
    """Row (sublane) tiling for an (M, K) operand: returns (tile, padded_M)."""
    if m >= cap:
        return cap, _round_up(m, cap)
    mp = _round_up(m, 8)
    return mp, mp


def _col_tile(np_):
    """Lane tiling for the padded output width (always a multiple of 128)."""
    if np_ <= 512:
        return np_
    if np_ % 512 == 0:
        return 512
    if np_ % 256 == 0:
        return 256
    return 128


# ---------------------------------------------------------------------------
# Pallas kernel 1: fused [optional LayerNorm] + matmul + bias + activation + residual
#   (covers every nn.LayerNorm / nn.Linear in the model; bf16 in / bf16 out)
# ---------------------------------------------------------------------------
def _mm_kernel(x_ref, w_ref, b_ref, *rest, act, k_valid, has_ln, has_res):
    idx = 0
    if has_ln:
        g_ref, bln_ref = rest[0], rest[1]
        idx = 2
    if has_res:
        res_ref = rest[idx]
        idx += 1
    o_ref = rest[idx]

    x = x_ref[...]                               # bf16
    if has_ln:
        xf = x.astype(jnp.float32)
        karr = xf.shape[1]
        if karr != k_valid:                      # padded token stream: stats over valid cols
            mask = jax.lax.broadcasted_iota(jnp.int32, xf.shape, 1) < k_valid
            xm = jnp.where(mask, xf, 0.0)
            mu = jnp.sum(xm, axis=-1, keepdims=True) * (1.0 / k_valid)
            xc = jnp.where(mask, xf - mu, 0.0)
        else:
            mu = jnp.mean(xf, axis=-1, keepdims=True)
            xc = xf - mu
        var = jnp.sum(xc * xc, axis=-1, keepdims=True) * (1.0 / k_valid)
        xn = xc * jax.lax.rsqrt(var + 1e-5)
        xb = (xn * g_ref[...] + bln_ref[...]).astype(jnp.bfloat16)
    else:
        xb = x

    y = jnp.dot(xb, w_ref[...], preferred_element_type=jnp.float32) + b_ref[...]
    if act == "leaky_relu":
        y = jnp.where(y >= 0, y, 0.2 * y)
    elif act == "gelu":
        # TODO(synk): tanh-approx GELU (PyTorch nn.GELU defaults to exact erf).
        y = jax.nn.gelu(y)
    elif act == "tanh":
        y = jnp.tanh(y)
    if has_res:
        y = y + res_ref[...].astype(jnp.float32)
    o_ref[...] = y.astype(o_ref.dtype)


@functools.partial(jax.jit, static_argnames=("k_valid", "act", "out_f32"))
def pallas_linear(x, w, b, ln_g=None, ln_b=None, res=None, *,
                  k_valid, act="none", out_f32=False):
    """y = act(LN?(x) @ w + b) [+ res].

    x   : (M, K) bf16 (K may be unaligned; no K padding is done)
    w   : (K, Np) bf16, output sections individually padded to 128 lanes at init
    b   : (1, Np) f32
    ln_g/ln_b : optional (1, K) f32 -> fused pre-LayerNorm over the first k_valid cols
    res : optional (M, Np) bf16 residual added in the epilogue
    returns (M, Np) bf16 (f32 if out_f32), padded lanes are exactly zero.
    """
    M, K = x.shape
    Kw, Np = w.shape
    assert Kw == K, (Kw, K)
    has_ln = ln_g is not None
    has_res = res is not None

    x = x.astype(jnp.bfloat16)
    if has_res:
        res = res.astype(jnp.bfloat16)

    tm, Mp = _row_tile(M)
    tn = _col_tile(Np)
    if Mp != M:
        x = jnp.pad(x, ((0, Mp - M), (0, 0)))
        if has_res:
            res = jnp.pad(res, ((0, Mp - M), (0, 0)))
    gm, gn = Mp // tm, Np // tn

    # Grid iteration order: keep the operand that would otherwise be re-streamed more
    # often resident across the inner sweep.
    x_bytes, w_bytes = Mp * K * 2, K * Np * 2
    if (gm - 1) * w_bytes <= (gn - 1) * x_bytes:
        grid = (gm, gn)
        xmap = lambda i, j: (i, 0)
        wmap = lambda i, j: (0, j)
        nmap = lambda i, j: (0, j)
        lmap = lambda i, j: (0, 0)
        omap = lambda i, j: (i, j)
    else:
        grid = (gn, gm)
        xmap = lambda j, i: (i, 0)
        wmap = lambda j, i: (0, j)
        nmap = lambda j, i: (0, j)
        lmap = lambda j, i: (0, 0)
        omap = lambda j, i: (i, j)

    in_specs = [pl.BlockSpec((tm, K), xmap),
                pl.BlockSpec((K, tn), wmap),
                pl.BlockSpec((1, tn), nmap)]
    args = [x, w, b]
    if has_ln:
        in_specs += [pl.BlockSpec((1, K), lmap), pl.BlockSpec((1, K), lmap)]
        args += [ln_g, ln_b]
    if has_res:
        in_specs.append(pl.BlockSpec((tm, tn), omap))
        args.append(res)

    out_dtype = jnp.float32 if out_f32 else jnp.bfloat16
    out = pl.pallas_call(
        functools.partial(_mm_kernel, act=act, k_valid=k_valid,
                          has_ln=has_ln, has_res=has_res),
        out_shape=jax.ShapeDtypeStruct((Mp, Np), out_dtype),
        grid=grid,
        in_specs=in_specs,
        out_specs=pl.BlockSpec((tm, tn), omap),
        compiler_params=pltpu.CompilerParams(
            dimension_semantics=("parallel", "parallel"),
            vmem_limit_bytes=48 * 1024 * 1024),
    )(*args)
    return out[:M] if Mp != M else out


# ---------------------------------------------------------------------------
# Pallas kernel 2: softmax attention
#   fast path (N <= 2048): one-shot softmax per Q tile, full K/V resident
#   flash path (N  > 2048): online softmax over KV tiles
# ---------------------------------------------------------------------------
_FAST_MAX_N = 2048


def _attn_fast_kernel(q_ref, k_ref, v_ref, o_ref, *, scale, n_valid, need_mask):
    q = q_ref[0]                                  # (tq, D) bf16
    k = k_ref[0]                                  # (Nk, D) bf16
    s = jax.lax.dot_general(q, k, (((1,), (1,)), ((), ())),
                            preferred_element_type=jnp.float32) * scale
    if need_mask:                                 # only emitted when key padding exists
        kid = jax.lax.broadcasted_iota(jnp.int32, s.shape, 1)
        s = jnp.where(kid < n_valid, s, -1e30)
    m = jnp.max(s, axis=-1, keepdims=True)
    p = jnp.exp(s - m)
    l = jnp.sum(p, axis=-1, keepdims=True)
    o = jnp.dot(p.astype(jnp.bfloat16), v_ref[0], preferred_element_type=jnp.float32)
    o_ref[0] = (o * pl.reciprocal(l, approx=True)).astype(o_ref.dtype)


def _flash_kernel(q_ref, k_ref, v_ref, o_ref, m_sc, l_sc, acc_sc,
                  *, scale, n_valid, tkv, need_mask):
    kv = pl.program_id(2)

    @pl.when(kv == 0)
    def _init():
        m_sc[...] = jnp.full_like(m_sc, -jnp.inf)
        l_sc[...] = jnp.zeros_like(l_sc)
        acc_sc[...] = jnp.zeros_like(acc_sc)

    q = q_ref[0]
    k = k_ref[0]
    s = jax.lax.dot_general(q, k, (((1,), (1,)), ((), ())),
                            preferred_element_type=jnp.float32) * scale
    if need_mask:
        kid = kv * tkv + jax.lax.broadcasted_iota(jnp.int32, s.shape, 1)
        s = jnp.where(kid < n_valid, s, -1e30)

    m_prev = m_sc[...]
    m_new = jnp.maximum(m_prev, jnp.max(s, axis=-1, keepdims=True))
    alpha = jnp.exp(m_prev - m_new)
    p = jnp.exp(s - m_new)
    l_sc[...] = alpha * l_sc[...] + jnp.sum(p, axis=-1, keepdims=True)
    acc_sc[...] = alpha * acc_sc[...] + jnp.dot(
        p.astype(jnp.bfloat16), v_ref[0], preferred_element_type=jnp.float32)
    m_sc[...] = m_new

    @pl.when(kv == pl.num_programs(2) - 1)
    def _finish():
        o_ref[0] = (acc_sc[...] * pl.reciprocal(l_sc[...], approx=True)).astype(o_ref.dtype)


@functools.partial(jax.jit, static_argnames=("scale",))
def pallas_attention(q, k, v, scale):
    """q/k/v: (G, N, D) bf16 -> softmax(q k^T * scale) v, bf16 out."""
    G, N, D = q.shape
    q = q.astype(jnp.bfloat16)
    k = k.astype(jnp.bfloat16)
    v = v.astype(jnp.bfloat16)

    if N <= _FAST_MAX_N:
        if N <= 512:
            Npad = _round_up(N, 8)
            tq = Npad
        else:
            tq = 512
            Npad = _round_up(N, tq)
        if Npad != N:
            pad = ((0, 0), (0, Npad - N), (0, 0))
            q, k, v = jnp.pad(q, pad), jnp.pad(k, pad), jnp.pad(v, pad)
        out = pl.pallas_call(
            functools.partial(_attn_fast_kernel, scale=scale, n_valid=N,
                              need_mask=(Npad != N)),
            out_shape=jax.ShapeDtypeStruct((G, Npad, D), jnp.bfloat16),
            grid=(G, Npad // tq),
            in_specs=[pl.BlockSpec((1, tq, D), lambda g, i: (g, i, 0)),
                      pl.BlockSpec((1, Npad, D), lambda g, i: (g, 0, 0)),
                      pl.BlockSpec((1, Npad, D), lambda g, i: (g, 0, 0))],
            out_specs=pl.BlockSpec((1, tq, D), lambda g, i: (g, i, 0)),
            compiler_params=pltpu.CompilerParams(
                dimension_semantics=("parallel", "parallel"),
                vmem_limit_bytes=48 * 1024 * 1024),
        )(q, k, v)
    else:
        T = 512
        Npad = _round_up(N, T)
        if Npad != N:
            pad = ((0, 0), (0, Npad - N), (0, 0))
            q, k, v = jnp.pad(q, pad), jnp.pad(k, pad), jnp.pad(v, pad)
        nt = Npad // T
        out = pl.pallas_call(
            functools.partial(_flash_kernel, scale=scale, n_valid=N, tkv=T,
                              need_mask=(Npad != N)),
            out_shape=jax.ShapeDtypeStruct((G, Npad, D), jnp.bfloat16),
            grid=(G, nt, nt),
            in_specs=[pl.BlockSpec((1, T, D), lambda g, qi, kv: (g, qi, 0)),
                      pl.BlockSpec((1, T, D), lambda g, qi, kv: (g, kv, 0)),
                      pl.BlockSpec((1, T, D), lambda g, qi, kv: (g, kv, 0))],
            out_specs=pl.BlockSpec((1, T, D), lambda g, qi, kv: (g, qi, 0)),
            scratch_shapes=[pltpu.VMEM((T, 1), jnp.float32),
                            pltpu.VMEM((T, 1), jnp.float32),
                            pltpu.VMEM((T, D), jnp.float32)],
            compiler_params=pltpu.CompilerParams(
                dimension_semantics=("parallel", "parallel", "arbitrary"),
                vmem_limit_bytes=48 * 1024 * 1024),
        )(q, k, v)
    if Npad != N:
        out = out[:, :N, :]
    return out


# ---------------------------------------------------------------------------
# JAX glue (NHWC): unfold (im2col), nearest upsample, bilinear resize
# ---------------------------------------------------------------------------
def unfold(x, patch, stride, pad):
    """nn.Unfold semantics on NHWC images: (B,H,W,C) -> (B, L, C*patch*patch).
    Feature ordering is channel-major (c, kh, kw), matching nn.Unfold."""
    cols = jax.lax.conv_general_dilated_patches(
        x, filter_shape=(patch, patch), window_strides=(stride, stride),
        padding=((pad, pad), (pad, pad)),
        dimension_numbers=("NHWC", "HWIO", "NHWC"))
    B, Ho, Wo, CK = cols.shape
    return cols.reshape(B, Ho * Wo, CK)


def upsample_nearest(x, s):
    if s == 1:
        return x
    return jnp.repeat(jnp.repeat(x, s, axis=1), s, axis=2)


def bilinear_resize_ac(x, oh, ow):
    """F.interpolate(..., mode='bilinear', align_corners=True) on NHWC."""
    B, H, W, C = x.shape

    def coords(o, i):
        if o == 1:
            return jnp.zeros((1,), jnp.float32)
        return jnp.arange(o, dtype=jnp.float32) * ((i - 1) / (o - 1))

    ys, xs = coords(oh, H), coords(ow, W)
    y0 = jnp.floor(ys).astype(jnp.int32)
    x0 = jnp.floor(xs).astype(jnp.int32)
    y1 = jnp.minimum(y0 + 1, H - 1)
    x1 = jnp.minimum(x0 + 1, W - 1)
    wy = (ys - y0)[None, :, None, None]
    wx = (xs - x0)[None, None, :, None]
    r0, r1 = jnp.take(x, y0, axis=1), jnp.take(x, y1, axis=1)
    v00, v01 = jnp.take(r0, x0, axis=2), jnp.take(r0, x1, axis=2)
    v10, v11 = jnp.take(r1, x0, axis=2), jnp.take(r1, x1, axis=2)
    return (v00 * (1 - wy) * (1 - wx) + v01 * (1 - wy) * wx +
            v10 * wy * (1 - wx) + v11 * wy * wx)


def get_sinusoid_encoding(n_position, d_hid):
    pos = jnp.arange(n_position, dtype=jnp.float32)[:, None]
    dim = jnp.arange(d_hid)
    rates = jnp.power(10000.0, (2.0 * (dim // 2).astype(jnp.float32)) / d_hid)
    table = pos / rates[None, :]
    table = jnp.where(dim[None, :] % 2 == 0, jnp.sin(table), jnp.cos(table))
    return table[None, :, :].astype(jnp.float32)


# ---------------------------------------------------------------------------
# token-level building blocks (heavy lifting via Pallas kernels)
# ---------------------------------------------------------------------------
def linear_tokens(x, lin, act="none", ln=None, res=None, out_f32=False):
    B, N, D = x.shape
    x2 = x.reshape(B * N, D)
    res2 = res.reshape(B * N, res.shape[-1]) if res is not None else None
    g = ln["g"] if ln is not None else None
    bb = ln["b"] if ln is not None else None
    kv = ln["d"] if ln is not None else D
    y = pallas_linear(x2, lin["w"], lin["b"], g, bb, res2,
                      k_valid=kv, act=act, out_f32=out_f32)
    return y.reshape(B, N, y.shape[-1])


def token_transformer(x, p, emb):
    """Token_performer-style block: fused LN+kqv -> attention -> proj(+v residual)
    -> fused LN+MLP(+residual).  Token width stays lane-padded (zeros in pad lanes)."""
    emb_p = _round_up(emb, 128)
    kqv = linear_tokens(x, p["kqv"], ln=p["norm1"])              # (B, N, 3*emb_p)
    k = kqv[..., :emb_p]
    q = kqv[..., emb_p:2 * emb_p]
    v = kqv[..., 2 * emb_p:]
    # TODO(synk): performer random-feature kernel replaced with exact softmax attention.
    y = pallas_attention(q, k, v, scale=float(emb) ** -0.5)
    y = linear_tokens(y, p["proj"], res=v)                       # v + proj(att)
    h = linear_tokens(y, p["fc1"], act="gelu", ln=p["norm2"])
    return linear_tokens(h, p["fc2"], res=y)                     # y + mlp(y)


def vit_block(x, p, num_heads):
    """timm-style ViT Block, qkv_bias=False, MLP act = LeakyReLU(0.2), drop_path=0."""
    B, N, D = x.shape
    dh = D // num_heads
    qkv = linear_tokens(x, p["qkv"], ln=p["norm1"])              # (B, N, 3D)
    q, k, v = qkv[..., :D], qkv[..., D:2 * D], qkv[..., 2 * D:]

    def split(t):
        return t.reshape(B, N, num_heads, dh).transpose(0, 2, 1, 3).reshape(
            B * num_heads, N, dh)

    att = pallas_attention(split(q), split(k), split(v), scale=float(dh) ** -0.5)
    att = att.reshape(B, num_heads, N, dh).transpose(0, 2, 1, 3).reshape(B, N, D)
    x = linear_tokens(att, p["proj"], res=x)                     # x + proj(att)
    h = linear_tokens(x, p["fc1"], act="leaky_relu", ln=p["norm2"])
    return linear_tokens(h, p["fc2"], res=x)                     # x + mlp(x)


def tokens_to_image(t, c, h, w):
    """(B, L, Cpad) lane-padded token stream -> NHWC image with the c valid channels."""
    return t[..., :c].reshape(t.shape[0], h, w, c)


def swt_down(x, p, cfg, attention=True):
    t = unfold(x, cfg["patch"], cfg["stride"], cfg["pad"])
    if attention:
        t = token_transformer(t, p["tp"], cfg["out"])
    return t


def swt_up(x, p, cfg, SC=None):
    # TODO(synk): nn.Upsample mode unspecified in reference; nearest used.
    x = upsample_nearest(x, cfg["up"])
    if SC is not None:
        x = jnp.concatenate([x, SC], axis=-1)
    t = unfold(x, cfg["patch"], 1, cfg["pad"])
    t = token_transformer(t, p["tp"], cfg["out"])
    return t, x.shape[1], x.shape[2]


# ---------------------------------------------------------------------------
# configs
# ---------------------------------------------------------------------------
def _down_cfgs(down_ratio, channels, patch):
    return [dict(inc=channels[i], out=channels[i + 1], patch=patch[i],
                 stride=down_ratio[i + 1] // down_ratio[i], pad=(patch[i] - 1) // 2)
            for i in range(len(down_ratio) - 1)]


def make_ptnet_cfg(img_size, down_ratio, channels, patch, embed_dim, depth,
                   num_heads=4, mlp_ratio=2.0):
    up_cfgs = []
    for i in range(1, len(down_ratio) - 2):
        pp = patch[-(i + 1)]
        up_cfgs.append(dict(inc=2 * channels[-(i + 1)], out=channels[-(i + 1) - 1], patch=pp,
                            up=down_ratio[-(i + 1)] // down_ratio[-(i + 1) - 1],
                            pad=(pp - 1) // 2))
    up_cfgs.append(dict(inc=2 * channels[1], out=channels[1], patch=patch[0],
                        up=down_ratio[2] // down_ratio[1], pad=(patch[0] - 1) // 2))
    up_cfgs.append(dict(inc=channels[1] + 1, out=channels[1], patch=patch[0],
                        up=down_ratio[1] // down_ratio[0], pad=(patch[0] - 1) // 2))
    n_pos = (img_size[0] // down_ratio[-1]) * (img_size[1] // down_ratio[-1])
    return dict(img_size=img_size, down_ratio=down_ratio, channels=channels, patch=patch,
                embed_dim=embed_dim, depth=depth, num_heads=num_heads, mlp_ratio=mlp_ratio,
                down_cfgs=_down_cfgs(down_ratio, channels, patch), up_cfgs=up_cfgs,
                n_pos=n_pos)


def make_local4_cfg(img_size, depth):
    down_ratio = [1, 1, 2, 4, 8]
    channels = [1, 32, 64, 128, 256]
    patch = [7, 3, 3, 3, 3]
    embed_dim = 256
    up_cfgs = []
    for i in range(1, len(down_ratio) - 4):       # empty with the default config
        pp = patch[-(i + 1)]
        up_cfgs.append(dict(inc=2 * channels[-(i + 1)], out=channels[-(i + 1) - 1], patch=pp,
                            up=down_ratio[-(i + 1)] // down_ratio[-(i + 1) - 1],
                            pad=(pp - 1) // 2))
    up_cfgs.append(dict(inc=2 * channels[-2] + 32, out=channels[-3], patch=patch[-2],
                        up=down_ratio[-2] // down_ratio[-3], pad=(patch[-2] - 1) // 2))
    up_cfgs.append(dict(inc=2 * channels[-3] + 32, out=channels[-4], patch=patch[-3],
                        up=down_ratio[-3] // down_ratio[-4], pad=(patch[-3] - 1) // 2))
    up_cfgs.append(dict(inc=2 * channels[1] + 32, out=channels[1], patch=patch[0],
                        up=down_ratio[2] // down_ratio[1], pad=(patch[0] - 1) // 2))
    up_cfgs.append(dict(inc=channels[1] + 1, out=channels[1], patch=patch[0],
                        up=down_ratio[1] // down_ratio[0], pad=(patch[0] - 1) // 2))
    n_pos = (img_size[0] // down_ratio[-1]) * (img_size[1] // down_ratio[-1])
    cfg = dict(img_size=img_size, down_ratio=down_ratio, channels=channels, patch=patch,
               embed_dim=embed_dim, depth=depth, num_heads=4, mlp_ratio=2.0,
               down_cfgs=_down_cfgs(down_ratio, channels, patch), up_cfgs=up_cfgs,
               n_pos=n_pos)
    cfg["g1"] = make_ptnet_cfg([img_size[0] // 2, img_size[1] // 2], [1, 1, 2, 4, 8],
                               [1, 32, 64, 128, 256], [7, 3, 3, 3, 3], 512, depth)
    cfg["g2"] = make_ptnet_cfg([img_size[0] // 4, img_size[1] // 4], [1, 1, 2, 4, 8],
                               [1, 32, 64, 128, 256], [7, 3, 3, 3, 3], 512, depth)
    cfg["g3"] = make_ptnet_cfg([img_size[0] // 8, img_size[1] // 8], [1, 1, 2, 4],
                               [1, 32, 64, 128], [7, 3, 3, 3], 512, depth)
    return cfg


# ---------------------------------------------------------------------------
# deterministic parameter init (bf16 weights; multi-output sections lane-padded)
# ---------------------------------------------------------------------------
class KeyGen:
    def __init__(self, seed):
        self.key = jax.random.PRNGKey(seed)

    def __call__(self):
        self.key, k = jax.random.split(self.key)
        return k


def init_linear(kg, k_in, k_arr, outs):
    """Weight columns laid out as [pad128(out_0) | pad128(out_1) | ...]; the first k_in
    rows are random, rows up to k_arr (lane-padded input width) are zero."""
    secs = []
    for o in outs:
        op = _round_up(o, 128)
        w = jax.random.normal(kg(), (k_in, o), jnp.float32) * 0.02
        w = jnp.pad(w, ((0, k_arr - k_in), (0, op - o)))
        secs.append(w)
    w = jnp.concatenate(secs, axis=1).astype(jnp.bfloat16)
    return dict(w=w, b=jnp.zeros((1, w.shape[1]), jnp.float32))


def init_ln(d, d_arr):
    g = jnp.pad(jnp.ones((d,), jnp.float32), (0, d_arr - d)).reshape(1, d_arr)
    return dict(g=g, b=jnp.zeros((1, d_arr), jnp.float32), d=d)


def init_token_transformer(kg, dim, emb):
    emb_p = _round_up(emb, 128)
    return dict(norm1=init_ln(dim, dim),
                kqv=init_linear(kg, dim, dim, [emb, emb, emb]),
                proj=init_linear(kg, emb, emb_p, [emb]),
                norm2=init_ln(emb, emb_p),
                fc1=init_linear(kg, emb, emb_p, [emb]),
                fc2=init_linear(kg, emb, emb_p, [emb]))


def init_block(kg, dim, num_heads, mlp_ratio):
    hidden = int(dim * mlp_ratio)
    hidden_p = _round_up(hidden, 128)
    return dict(norm1=init_ln(dim, dim),
                qkv=init_linear(kg, dim, dim, [dim, dim, dim]),   # qkv_bias=False (zeros)
                proj=init_linear(kg, dim, dim, [dim]),
                norm2=init_ln(dim, dim),
                fc1=init_linear(kg, dim, dim, [hidden]),
                fc2=init_linear(kg, hidden, hidden_p, [dim]))


def init_core(kg, cfg):
    ch, patch = cfg["channels"], cfg["patch"]
    return dict(
        down=[dict(tp=init_token_transformer(kg, c["inc"] * c["patch"] ** 2, c["out"]))
              for c in cfg["down_cfgs"]],
        up=[dict(tp=init_token_transformer(kg, c["inc"] * c["patch"] ** 2, c["out"]))
            for c in cfg["up_cfgs"]],
        bottleneck=[init_block(kg, cfg["embed_dim"], cfg["num_heads"], cfg["mlp_ratio"])
                    for _ in range(cfg["depth"])],
        PE=get_sinusoid_encoding(cfg["n_pos"], cfg["embed_dim"]).astype(jnp.bfloat16),
        bot_proj=init_linear(kg, ch[-2] * patch[-1] ** 2, ch[-2] * patch[-1] ** 2,
                             [cfg["embed_dim"]]),
        bot_proj2=init_linear(kg, cfg["embed_dim"], cfg["embed_dim"], [ch[-2]]),
        final_proj=init_linear(kg, ch[1], _round_up(ch[1], 128), [1]),
    )


def init_local4(seed, cfg):
    kg = KeyGen(seed)
    p = init_core(kg, cfg)
    p["g1"] = init_core(kg, cfg["g1"])
    p["g2"] = init_core(kg, cfg["g2"])
    p["g3"] = init_core(kg, cfg["g3"])
    return p


# ---------------------------------------------------------------------------
# forward passes
# ---------------------------------------------------------------------------
def _encode(p, cfg, x):
    """Down path + bottleneck.  x is NHWC bf16; returns (feature map at /ratio[-1], skips)."""
    size, ratio = cfg["img_size"], cfg["down_ratio"]
    SC = []
    for i in range(len(cfg["down_cfgs"]) - 1):
        dc = cfg["down_cfgs"][i]
        t = swt_down(x, p["down"][i], dc, attention=True)
        H, W = size[0] // ratio[i + 1], size[1] // ratio[i + 1]
        x = tokens_to_image(t, dc["out"], H, W)
        SC.append(x)
    dc = cfg["down_cfgs"][-1]
    t = unfold(x, dc["patch"], dc["stride"], dc["pad"])        # attention=False branch
    x = linear_tokens(t, p["bot_proj"])
    x = x + p["PE"]
    for bp in p["bottleneck"]:
        x = vit_block(x, bp, cfg["num_heads"])
    x = linear_tokens(x, p["bot_proj2"])
    H, W = size[0] // ratio[-1], size[1] // ratio[-1]
    x = tokens_to_image(x, cfg["channels"][-2], H, W)
    return x, SC


def ptnet_forward(p, cfg, x):
    """PTNet with skip_connection=True, individual_use=False (the global generators)."""
    x0 = x
    x, SC = _encode(p, cfg, x)
    ucs = cfg["up_cfgs"]
    for i in range(len(ucs) - 1):
        t, H, W = swt_up(x, p["up"][i], ucs[i], SC=SC[-(i + 1)])
        x = tokens_to_image(t, ucs[i]["out"], H, W)
    t, H, W = swt_up(x, p["up"][-1], ucs[-1], SC=x0)
    return tokens_to_image(t, ucs[-1]["out"], H, W)


def ptnet_local4_forward(p, cfg, x_nchw):
    size = cfg["img_size"]
    x = jnp.transpose(x_nchw, (0, 2, 3, 1))                    # NCHW -> NHWC, f32
    g1_in = bilinear_resize_ac(x, size[0] // 2, size[1] // 2).astype(jnp.bfloat16)
    g2_in = bilinear_resize_ac(x, size[0] // 4, size[1] // 4).astype(jnp.bfloat16)
    g3_in = bilinear_resize_ac(x, size[0] // 8, size[1] // 8).astype(jnp.bfloat16)
    x = x.astype(jnp.bfloat16)
    x0 = x
    g_res = ptnet_forward(p["g1"], cfg["g1"], g1_in)
    g_res2 = ptnet_forward(p["g2"], cfg["g2"], g2_in)
    g_res3 = ptnet_forward(p["g3"], cfg["g3"], g3_in)

    x, SC = _encode(p, cfg, x)
    ucs, ups = cfg["up_cfgs"], p["up"]
    n = len(ucs)
    for i in range(n - 4):                                     # up_blocks[:-4] (empty here)
        t, H, W = swt_up(x, ups[i], ucs[i], SC=SC[-(i + 1)])
        x = tokens_to_image(t, ucs[i]["out"], H, W)
    t, H, W = swt_up(jnp.concatenate([x, g_res3], axis=-1), ups[n - 4], ucs[n - 4], SC=SC[2])
    x = tokens_to_image(t, ucs[n - 4]["out"], H, W)
    t, H, W = swt_up(jnp.concatenate([x, g_res2], axis=-1), ups[n - 3], ucs[n - 3], SC=SC[1])
    x = tokens_to_image(t, ucs[n - 3]["out"], H, W)
    t, H, W = swt_up(jnp.concatenate([x, g_res], axis=-1), ups[n - 2], ucs[n - 2], SC=SC[0])
    x = tokens_to_image(t, ucs[n - 2]["out"], H, W)
    t, _, _ = swt_up(x, ups[n - 1], ucs[n - 1], SC=x0)         # reshape=False path
    out = linear_tokens(t, p["final_proj"], act="tanh", out_f32=True)
    out = out[..., :1].reshape(out.shape[0], size[0], size[1], 1)
    return jnp.transpose(out, (0, 3, 1, 2))                    # back to NCHW


# ---------------------------------------------------------------------------
# main
# ---------------------------------------------------------------------------
if __name__ == "__main__":
    # Small-shape instance of PTNet_local_4: img 32x32 (multiple of 32 so all three global
    # generators tile cleanly), depth=2 bottleneck, batch=2.
    B = 2
    img_size = [32, 32]
    depth = 2

    cfg = make_local4_cfg(img_size, depth)
    params = init_local4(seed=42, cfg=cfg)

    x = jax.random.normal(jax.random.PRNGKey(0), (B, 1, img_size[0], img_size[1]),
                          dtype=jnp.float32)

    out = ptnet_local4_forward(params, cfg, x)
    out = jax.block_until_ready(out)

    assert out.shape == (B, 1, img_size[0], img_size[1]), out.shape
    assert bool(jnp.all(jnp.isfinite(out)))
    assert bool(jnp.all(jnp.abs(out) <= 1.0 + 1e-6))   # tanh output range
    print("KERNEL_OK")
</pallas_src>

<mosaic_0001>
module attributes {stable_mosaic.version = 11 : i64} {
  func.func @_mm_kernel(%arg0: i32, %arg1: i32, %arg2: memref<512x49xbf16, #tpu.memory_space<vmem>>, %arg3: memref<49x384xbf16, #tpu.memory_space<vmem>>, %arg4: memref<1x384xf32, #tpu.memory_space<vmem>>, %arg5: memref<1x49xf32, #tpu.memory_space<vmem>>, %arg6: memref<1x49xf32, #tpu.memory_space<vmem>>, %arg7: memref<512x384xbf16, #tpu.memory_space<vmem>>) attributes {dimension_semantics = [#tpu.dimension_semantics<parallel>, #tpu.dimension_semantics<parallel>], iteration_bounds = array<i64: 1, 1>, scalar_prefetch = 0 : i64, scratch_operands = 0 : i64, tpu.core_type = #tpu.core_type<tc>, window_params = [{transform_indices = @transform_0, window_bounds = array<i64: 512, 49>}, {transform_indices = @transform_1, window_bounds = array<i64: 49, 384>}, {transform_indices = @transform_2, window_bounds = array<i64: 1, 384>}, {pipeline_mode = #tpu.pipeline_mode<synchronous>, transform_indices = @transform_3, window_bounds = array<i64: 1, 49>}, {pipeline_mode = #tpu.pipeline_mode<synchronous>, transform_indices = @transform_4, window_bounds = array<i64: 1, 49>}, {transform_indices = @transform_5, window_bounds = array<i64: 512, 384>}]} {
    %c0 = arith.constant 0 : index
    %c0_0 = arith.constant 0 : index
    %0 = vector.load %arg2[%c0, %c0_0] : memref<512x49xbf16, #tpu.memory_space<vmem>>, vector<512x49xbf16>
    %1 = arith.extf %0 : vector<512x49xbf16> to vector<512x49xf32>
    %cst = arith.constant dense<0.000000e+00> : vector<512xf32>
    %2 = vector.multi_reduction <add>, %1, %cst [1] : vector<512x49xf32> to vector<512xf32>
    %3 = vector.shape_cast %2 : vector<512xf32> to vector<512x1xf32>
    %cst_1 = arith.constant 4.900000e+01 : f32
    %4 = vector.broadcast %cst_1 : f32 to vector<512x1xf32>
    %5 = arith.divf %3, %4 : vector<512x1xf32>
    %6 = vector.broadcast %5 : vector<512x1xf32> to vector<512x49xf32>
    %7 = arith.subf %1, %6 : vector<512x49xf32>
    %8 = arith.mulf %7, %7 : vector<512x49xf32>
    %cst_2 = arith.constant dense<0.000000e+00> : vector<512xf32>
    %9 = vector.multi_reduction <add>, %8, %cst_2 [1] : vector<512x49xf32> to vector<512xf32>
    %10 = vector.shape_cast %9 : vector<512xf32> to vector<512x1xf32>
    %cst_3 = arith.constant 0.0204081628 : f32
    %11 = vector.broadcast %cst_3 : f32 to vector<512x1xf32>
    %12 = arith.mulf %10, %11 : vector<512x1xf32>
    %cst_4 = arith.constant 9.99999974E-6 : f32
    %13 = vector.broadcast %cst_4 : f32 to vector<512x1xf32>
    %14 = arith.addf %12, %13 : vector<512x1xf32>
    %15 = math.rsqrt %14 : vector<512x1xf32>
    %16 = vector.broadcast %15 : vector<512x1xf32> to vector<512x49xf32>
    %17 = arith.mulf %7, %16 : vector<512x49xf32>
    %c0_5 = arith.constant 0 : index
    %c0_6 = arith.constant 0 : index
    %18 = vector.load %arg5[%c0_5, %c0_6] : memref<1x49xf32, #tpu.memory_space<vmem>>, vector<1x49xf32>
    %19 = vector.broadcast %18 : vector<1x49xf32> to vector<512x49xf32>
    %20 = arith.mulf %17, %19 : vector<512x49xf32>
    %c0_7 = arith.constant 0 : index
    %c0_8 = arith.constant 0 : index
    %21 = vector.load %arg6[%c0_7, %c0_8] : memref<1x49xf32, #tpu.memory_space<vmem>>, vector<1x49xf32>
    %22 = vector.broadcast %21 : vector<1x49xf32> to vector<512x49xf32>
    %23 = arith.addf %20, %22 : vector<512x49xf32>
    %24 = arith.truncf %23 : vector<512x49xf32> to vector<512x49xbf16>
    %c0_9 = arith.constant 0 : index
    %c0_10 = arith.constant 0 : index
    %25 = vector.load %arg3[%c0_9, %c0_10] : memref<49x384xbf16, #tpu.memory_space<vmem>>, vector<49x384xbf16>
    %cst_11 = arith.constant dense<0.000000e+00> : vector<512x384xf32>
    %26 = tpu.matmul %24, %25, %cst_11 {dimension_numbers = #tpu.dot_dimension_numbers<[1], [0], [0], [1], [0, 0, 1, 1], [], []>} : vector<512x49xbf16>, vector<49x384xbf16>, vector<512x384xf32> -> vector<512x384xf32>
    %c0_12 = arith.constant 0 : index
    %c0_13 = arith.constant 0 : index
    %27 = vector.load %arg4[%c0_12, %c0_13] : memref<1x384xf32, #tpu.memory_space<vmem>>, vector<1x384xf32>
    %28 = vector.broadcast %27 : vector<1x384xf32> to vector<512x384xf32>
    %29 = arith.addf %26, %28 : vector<512x384xf32>
    %30 = arith.truncf %29 : vector<512x384xf32> to vector<512x384xbf16>
    %c0_14 = arith.constant 0 : index
    %c0_15 = arith.constant 0 : index
    %31 = vector.load %arg7[%c0_14, %c0_15] : memref<512x384xbf16, #tpu.memory_space<vmem>>, vector<512x384xbf16>
    tpu.vector_store %arg7[%c0_14, %c0_15], %30 {strides = array<i32>} : memref<512x384xbf16, #tpu.memory_space<vmem>>, vector<512x384xbf16>,
    return
  }
  func.func @transform_0(%arg0: i32, %arg1: i32) -> (i32, i32) {
    %c0_i32 = arith.constant 0 : i32
    %c0_i32_0 = arith.constant 0 : i32
    return %arg0, %c0_i32 : i32, i32
  }
  func.func @transform_1(%arg0: i32, %arg1: i32) -> (i32, i32) {
    %c0_i32 = arith.constant 0 : i32
    %c0_i32_0 = arith.constant 0 : i32
    return %c0_i32, %arg1 : i32, i32
  }
  func.func @transform_2(%arg0: i32, %arg1: i32) -> (i32, i32) {
    %c0_i32 = arith.constant 0 : i32
    %c0_i32_0 = arith.constant 0 : i32
    return %c0_i32, %arg1 : i32, i32
  }
  func.func @transform_3(%arg0: i32, %arg1: i32) -> (i32, i32) {
    %c0_i32 = arith.constant 0 : i32
    %c0_i32_0 = arith.constant 0 : i32
    %c0_i32_1 = arith.constant 0 : i32
    return %c0_i32, %c0_i32_0 : i32, i32
  }
  func.func @transform_4(%arg0: i32, %arg1: i32) -> (i32, i32) {
    %c0_i32 = arith.constant 0 : i32
    %c0_i32_0 = arith.constant 0 : i32
    %c0_i32_1 = arith.constant 0 : i32
    return %c0_i32, %c0_i32_0 : i32, i32
  }
  func.func @transform_5(%arg0: i32, %arg1: i32) -> (i32, i32) {
    %c0_i32 = arith.constant 0 : i32
    return %arg0, %arg1 : i32, i32
  }
}

</mosaic_0001>

<llo_original>
// kernel: pallas_linear.1
$region0: #{pallas_linear.1}
  #allocation0 [shape = 'u32[]', space=smem, size = 0x4, offset = 0x4, fixed_abs, tag = 'smem constant byte address 0x4 - core index']
  #allocation1 [shape = 'u32[72,128]{1,0:T(1,128)}', space=vmem, size = 0x9000, scoped, tag = 'internal scratch']
  %s0 = inlined_call_operand.vmem [shape: bf16[512,49], index: 0, kind: input, shape index: {}]
  %s1 = inlined_call_operand.vmem [shape: bf16[49,384], index: 1, kind: input, shape index: {}]
  %s2 = inlined_call_operand.vmem [shape: f32[1,384], index: 2, kind: input, shape index: {}]
  %s3 = inlined_call_operand.vmem [shape: f32[1,49], index: 3, kind: input, shape index: {}]
  %s4 = inlined_call_operand.vmem [shape: f32[1,49], index: 4, kind: input, shape index: {}]
  %s5 = inlined_call_operand.hbm [shape: bf16[512,384], index: 5, kind: output, shape index: {}]
  %s6 = sld [smem:[#allocation0]]
  $region30: #{pallas_linear.1} parent=0
    _
  %s8 = ssub.s32 1, %s6
  %s9 = scalar_select 0, %s8, %s6
  $region1: #{pallas_linear.1} parent=0
    #allocation2 [shape = 'u8[393216]{0}', space=vmem, size = 0x60000, scoped, tag = 'output window, operand 0, single buffered']
    #allocation3 [shape = 's32[1]{0}', space=sflag, size = 0x4, scoped, tag = 'scoped memory for pallas_linear.1']
    %10 = vsyncpa [#allocation3], 0
    // Predicated region
    $region2: #{pallas_linear.1} parent=1 // pred_check
      _
    $region3: #{pallas_linear.1} parent=1 // pred_check_branch
      %12 = sbr.rel (0) target = $region5
    $region4: #{pallas_linear.1} parent=1 // pred_region
      _
    $region5: #{pallas_linear.1} parent=1 // pred_fallthru
      _
    // Predicated region
    $region6: #{pallas_linear.1} parent=1 // pred_check
      _
    $region7: #{pallas_linear.1} parent=1 // pred_check_branch
      %14 = sbr.rel (0) target = $region9
    $region8: #{pallas_linear.1} parent=1 // pred_region
      _
    $region9: #{pallas_linear.1} parent=1 // pred_fallthru
      _
    // Predicated region
    $region10: #{pallas_linear.1} parent=1 // pred_check
      _
    $region11: #{pallas_linear.1} parent=1 // pred_check_branch
      %16 = sbr.rel (0) target = $region13
    $region12: #{pallas_linear.1} parent=1 // pred_region
      _
    $region13: #{pallas_linear.1} parent=1 // pred_fallthru
      _
    // Predicated region
    $region14: #{pallas_linear.1} parent=1 // pred_check
      _
    $region15: #{pallas_linear.1} parent=1 // pred_check_branch
      %18 = sbr.rel (0) target = $region17
    $region16: #{pallas_linear.1} parent=1 // pred_region
      _
    $region17: #{pallas_linear.1} parent=1 // pred_fallthru
      _
    // Predicated region
    $region18: #{pallas_linear.1} parent=1 // pred_check
      _
    $region19: #{pallas_linear.1} parent=1 // pred_check_branch
      %20 = sbr.rel (0) target = $region21
    $region20: #{pallas_linear.1} parent=1 // pred_region
      _
    $region21: #{pallas_linear.1} parent=1 // pred_fallthru
      _
    %v22 = vld [vmem:[%s0] sm:$0xf]
    %v23 = vld [vmem:[%s0 + $0x4] sm:$0xf]
    %v24 = vld [vmem:[%s0 + $0x8] sm:$0xf]
    %v25 = vld [vmem:[%s0 + $0xc] sm:$0xf]
    %v26 = vld [vmem:[%s0 + $0x10] sm:$0xf]
    %v27 = vld [vmem:[%s0 + $0x14] sm:$0xf]
    %v28 = vld [vmem:[%s0 + $0x18] sm:$0xf]
    %v29 = vld [vmem:[%s0 + $0x1c] sm:$0xf]
    %v30 = vld [vmem:[%s0 + $0x20] sm:$0xf]
    %v31 = vld [vmem:[%s0 + $0x24] sm:$0xf]
    %v32 = vld [vmem:[%s0 + $0x28] sm:$0xf]
    %v33 = vld [vmem:[%s0 + $0x2c] sm:$0xf]
    %v34 = vld [vmem:[%s0 + $0x30] sm:$0xf]
    %v35 = vld [vmem:[%s0 + $0x34] sm:$0xf]
    %v36 = vld [vmem:[%s0 + $0x38] sm:$0xf]
    %v37 = vld [vmem:[%s0 + $0x3c] sm:$0xf]
    %v38 = vld [vmem:[%s0 + $0x40] sm:$0xf]
    %v39 = vld [vmem:[%s0 + $0x44] sm:$0xf]
    %v40 = vld [vmem:[%s0 + $0x48] sm:$0xf]
    %v41 = vld [vmem:[%s0 + $0x4c] sm:$0xf]
    %v42 = vld [vmem:[%s0 + $0x50] sm:$0xf]
    %v43 = vld [vmem:[%s0 + $0x54] sm:$0xf]
    %v44 = vld [vmem:[%s0 + $0x58] sm:$0xf]
    %v45 = vld [vmem:[%s0 + $0x5c] sm:$0xf]
    %v46 = vld [vmem:[%s0 + $0x60] sm:$0xf]
    %v47 = vld [vmem:[%s0 + $0x64] sm:$0xf]
    %v48 = vld [vmem:[%s0 + $0x68] sm:$0xf]
    %v49 = vld [vmem:[%s0 + $0x6c] sm:$0xf]
    %v50 = vld [vmem:[%s0 + $0x70] sm:$0xf]
    %v51 = vld [vmem:[%s0 + $0x74] sm:$0xf]
    %v52 = vld [vmem:[%s0 + $0x78] sm:$0xf]
    %v53 = vld [vmem:[%s0 + $0x7c] sm:$0xf]
    %v54 = vld [vmem:[%s0 + $0x80] sm:$0xf]
    %v55 = vld [vmem:[%s0 + $0x84] sm:$0xf]
    %v56 = vld [vmem:[%s0 + $0x88] sm:$0xf]
    %v57 = vld [vmem:[%s0 + $0x8c] sm:$0xf]
    %v58 = vld [vmem:[%s0 + $0x90] sm:$0xf]
    %v59 = vld [vmem:[%s0 + $0x94] sm:$0xf]
    %v60 = vld [vmem:[%s0 + $0x98] sm:$0xf]
    %v61 = vld [vmem:[%s0 + $0x9c] sm:$0xf]
    %v62 = vld [vmem:[%s0 + $0xa0] sm:$0xf]
    %v63 = vld [vmem:[%s0 + $0xa4] sm:$0xf]
    %v64 = vld [vmem:[%s0 + $0xa8] sm:$0xf]
    %v65 = vld [vmem:[%s0 + $0xac] sm:$0xf]
    %v66 = vld [vmem:[%s0 + $0xb0] sm:$0xf]
    %v67 = vld [vmem:[%s0 + $0xb4] sm:$0xf]
    %v68 = vld [vmem:[%s0 + $0xb8] sm:$0xf]
    %v69 = vld [vmem:[%s0 + $0xbc] sm:$0xf]
    %v70 = vld [vmem:[%s0 + $0xc0] sm:$0xf]
    %v71 = vld [vmem:[%s0 + $0xc4] sm:$0xf]
    %v72 = vld [vmem:[%s0 + $0xc8] sm:$0xf]
    %v73 = vld [vmem:[%s0 + $0xcc] sm:$0xf]
    %v74 = vld [vmem:[%s0 + $0xd0] sm:$0xf]
    %v75 = vld [vmem:[%s0 + $0xd4] sm:$0xf]
    %v76 = vld [vmem:[%s0 + $0xd8] sm:$0xf]
    %v77 = vld [vmem:[%s0 + $0xdc] sm:$0xf]
    %v78 = vld [vmem:[%s0 + $0xe0] sm:$0xf]
    %v79 = vld [vmem:[%s0 + $0xe4] sm:$0xf]
    %v80 = vld [vmem:[%s0 + $0xe8] sm:$0xf]
    %v81 = vld [vmem:[%s0 + $0xec] sm:$0xf]
    %v82 = vld [vmem:[%s0 + $0xf0] sm:$0xf]
    %v83 = vld [vmem:[%s0 + $0xf4] sm:$0xf]
    %v84 = vld [vmem:[%s0 + $0xf8] sm:$0xf]
    %v85 = vld [vmem:[%s0 + $0xfc] sm:$0xf]
    %v86 = vunpack.c.l.bf16 %v22
    %v87 = vunpack.c.l.bf16 %v23
    %v88 = vunpack.c.l.bf16 %v24
    %v89 = vunpack.c.l.bf16 %v25
    %v90 = vunpack.c.l.bf16 %v26
    %v91 = vunpack.c.l.bf16 %v27
    %v92 = vunpack.c.l.bf16 %v28
    %v93 = vunpack.c.l.bf16 %v29
    %v94 = vunpack.c.l.bf16 %v30
    %v95 = vunpack.c.l.bf16 %v31
    %v96 = vunpack.c.l.bf16 %v32
    %v97 = vunpack.c.l.bf16 %v33
    %v98 = vunpack.c.l.bf16 %v34
    %v99 = vunpack.c.l.bf16 %v35
    %v100 = vunpack.c.l.bf16 %v36
    %v101 = vunpack.c.l.bf16 %v37
    %v102 = vunpack.c.l.bf16 %v38
    %v103 = vunpack.c.l.bf16 %v39
    %v104 = vunpack.c.l.bf16 %v40
    %v105 = vunpack.c.l.bf16 %v41
    %v106 = vunpack.c.l.bf16 %v42
    %v107 = vunpack.c.l.bf16 %v43
    %v108 = vunpack.c.l.bf16 %v44
    %v109 = vunpack.c.l.bf16 %v45
    %v110 = vunpack.c.l.bf16 %v46
    %v111 = vunpack.c.l.bf16 %v47
    %v112 = vunpack.c.l.bf16 %v48
    %v113 = vunpack.c.l.bf16 %v49
    %v114 = vunpack.c.l.bf16 %v50
    %v115 = vunpack.c.l.bf16 %v51
    %v116 = vunpack.c.l.bf16 %v52
    %v117 = vunpack.c.l.bf16 %v53
    %v118 = vunpack.c.l.bf16 %v54
    %v119 = vunpack.c.l.bf16 %v55
    %v120 = vunpack.c.l.bf16 %v56
    %v121 = vunpack.c.l.bf16 %v57
    %v122 = vunpack.c.l.bf16 %v58
    %v123 = vunpack.c.l.bf16 %v59
    %v124 = vunpack.c.l.bf16 %v60
    %v125 = vunpack.c.l.bf16 %v61
    %v126 = vunpack.c.l.bf16 %v62
    %v127 = vunpack.c.l.bf16 %v63
    %v128 = vunpack.c.l.bf16 %v64
    %v129 = vunpack.c.l.bf16 %v65
    %v130 = vunpack.c.l.bf16 %v66
    %v131 = vunpack.c.l.bf16 %v67
    %v132 = vunpack.c.l.bf16 %v68
    %v133 = vunpack.c.l.bf16 %v69
    %v134 = vunpack.c.l.bf16 %v70
    %v135 = vunpack.c.l.bf16 %v71
    %v136 = vunpack.c.l.bf16 %v72
    %v137 = vunpack.c.l.bf16 %v73
    %v138 = vunpack.c.l.bf16 %v74
    %v139 = vunpack.c.l.bf16 %v75
    %v140 = vunpack.c.l.bf16 %v76
    %v141 = vunpack.c.l.bf16 %v77
    %v142 = vunpack.c.l.bf16 %v78
    %v143 = vunpack.c.l.bf16 %v79
    %v144 = vunpack.c.l.bf16 %v80
    %v145 = vunpack.c.l.bf16 %v81
    %v146 = vunpack.c.l.bf16 %v82
    %v147 = vunpack.c.l.bf16 %v83
    %v148 = vunpack.c.l.bf16 %v84
    %v149 = vunpack.c.l.bf16 %v85
    %vm150 = vcmask 400384
    %v151 = vsel %vm150, %v86, 0.0
    %152 = vadd.xlane.f32.xlu0 %v151
    %v153 = vpop.xlane.xlu0 %152
    %v154 = vsel %vm150, %v87, 0.0
    %155 = vadd.xlane.f32.xlu0 %v154
    %v156 = vpop.xlane.xlu0 %155
    %v157 = vsel %vm150, %v88, 0.0
    %158 = vadd.xlane.f32.xlu0 %v157
    %v159 = vpop.xlane.xlu0 %158
    %v160 = vsel %vm150, %v89, 0.0
    %161 = vadd.xlane.f32.xlu0 %v160
    %v162 = vpop.xlane.xlu0 %161
    %v163 = vsel %vm150, %v90, 0.0
    %164 = vadd.xlane.f32.xlu0 %v163
    %v165 = vpop.xlane.xlu0 %164
    %v166 = vsel %vm150, %v91, 0.0
    %167 = vadd.xlane.f32.xlu0 %v166
    %v168 = vpop.xlane.xlu0 %167
    %v169 = vsel %vm150, %v92, 0.0
    %170 = vadd.xlane.f32.xlu0 %v169
    %v171 = vpop.xlane.xlu0 %170
    %v172 = vsel %vm150, %v93, 0.0
    %173 = vadd.xlane.f32.xlu0 %v172
    %v174 = vpop.xlane.xlu0 %173
    %v175 = vsel %vm150, %v94, 0.0
    %176 = vadd.xlane.f32.xlu0 %v175
    %v177 = vpop.xlane.xlu0 %176
    %v178 = vsel %vm150, %v95, 0.0
    %179 = vadd.xlane.f32.xlu0 %v178
    %v180 = vpop.xlane.xlu0 %179
    %v181 = vsel %vm150, %v96, 0.0
    %182 = vadd.xlane.f32.xlu0 %v181
    %v183 = vpop.xlane.xlu0 %182
    %v184 = vsel %vm150, %v97, 0.0
    %185 = vadd.xlane.f32.xlu0 %v184
    %v186 = vpop.xlane.xlu0 %185
    %v187 = vsel %vm150, %v98, 0.0
    %188 = vadd.xlane.f32.xlu0 %v187
    %v189 = vpop.xlane.xlu0 %188
    %v190 = vsel %vm150, %v99, 0.0
    %191 = vadd.xlane.f32.xlu0 %v190
    %v192 = vpop.xlane.xlu0 %191
    %v193 = vsel %vm150, %v100, 0.0
    %194 = vadd.xlane.f32.xlu0 %v193
    %v195 = vpop.xlane.xlu0 %194
    %v196 = vsel %vm150, %v101, 0.0
    %197 = vadd.xlane.f32.xlu0 %v196
    %v198 = vpop.xlane.xlu0 %197
    %v199 = vsel %vm150, %v102, 0.0
    %200 = vadd.xlane.f32.xlu0 %v199
    %v201 = vpop.xlane.xlu0 %200
    %v202 = vsel %vm150, %v103, 0.0
    %203 = vadd.xlane.f32.xlu0 %v202
    %v204 = vpop.xlane.xlu0 %203
    %v205 = vsel %vm150, %v104, 0.0
    %206 = vadd.xlane.f32.xlu0 %v205
    %v207 = vpop.xlane.xlu0 %206
    %v208 = vsel %vm150, %v105, 0.0
    %209 = vadd.xlane.f32.xlu0 %v208
    %v210 = vpop.xlane.xlu0 %209
    %v211 = vsel %vm150, %v106, 0.0
    %212 = vadd.xlane.f32.xlu0 %v211
    %v213 = vpop.xlane.xlu0 %212
    %v214 = vsel %vm150, %v107, 0.0
    %215 = vadd.xlane.f32.xlu0 %v214
    %v216 = vpop.xlane.xlu0 %215
    %v217 = vsel %vm150, %v108, 0.0
    %218 = vadd.xlane.f32.xlu0 %v217
    %v219 = vpop.xlane.xlu0 %218
    %v220 = vsel %vm150, %v109, 0.0
    %221 = vadd.xlane.f32.xlu0 %v220
    %v222 = vpop.xlane.xlu0 %221
    %v223 = vsel %vm150, %v110, 0.0
    %224 = vadd.xlane.f32.xlu0 %v223
    %v225 = vpop.xlane.xlu0 %224
    %v226 = vsel %vm150, %v111, 0.0
    %227 = vadd.xlane.f32.xlu0 %v226
    %v228 = vpop.xlane.xlu0 %227
    %v229 = vsel %vm150, %v112, 0.0
    %230 = vadd.xlane.f32.xlu0 %v229
    %v231 = vpop.xlane.xlu0 %230
    %v232 = vsel %vm150, %v113, 0.0
    %233 = vadd.xlane.f32.xlu0 %v232
    %v234 = vpop.xlane.xlu0 %233
    %v235 = vsel %vm150, %v114, 0.0
    %236 = vadd.xlane.f32.xlu0 %v235
    %v237 = vpop.xlane.xlu0 %236
    %v238 = vsel %vm150, %v115, 0.0
    %239 = vadd.xlane.f32.xlu0 %v238
    %v240 = vpop.xlane.xlu0 %239
    %v241 = vsel %vm150, %v116, 0.0
    %242 = vadd.xlane.f32.xlu0 %v241
    %v243 = vpop.xlane.xlu0 %242
    %v244 = vsel %vm150, %v117, 0.0
    %245 = vadd.xlane.f32.xlu0 %v244
    %v246 = vpop.xlane.xlu0 %245
    %v247 = vsel %vm150, %v118, 0.0
    %248 = vadd.xlane.f32.xlu0 %v247
    %v249 = vpop.xlane.xlu0 %248
    %v250 = vsel %vm150, %v119, 0.0
    %251 = vadd.xlane.f32.xlu0 %v250
    %v252 = vpop.xlane.xlu0 %251
    %v253 = vsel %vm150, %v120, 0.0
    %254 = vadd.xlane.f32.xlu0 %v253
    %v255 = vpop.xlane.xlu0 %254
    %v256 = vsel %vm150, %v121, 0.0
    %257 = vadd.xlane.f32.xlu0 %v256
    %v258 = vpop.xlane.xlu0 %257
    %v259 = vsel %vm150, %v122, 0.0
    %260 = vadd.xlane.f32.xlu0 %v259
    %v261 = vpop.xlane.xlu0 %260
    %v262 = vsel %vm150, %v123, 0.0
    %263 = vadd.xlane.f32.xlu0 %v262
    %v264 = vpop.xlane.xlu0 %263
    %v265 = vsel %vm150, %v124, 0.0
    %266 = vadd.xlane.f32.xlu0 %v265
    %v267 = vpop.xlane.xlu0 %266
    %v268 = vsel %vm150, %v125, 0.0
    %269 = vadd.xlane.f32.xlu0 %v268
    %v270 = vpop.xlane.xlu0 %269
    %v271 = vsel %vm150, %v126, 0.0
    %272 = vadd.xlane.f32.xlu0 %v271
    %v273 = vpop.xlane.xlu0 %272
    %v274 = vsel %vm150, %v127, 0.0
    %275 = vadd.xlane.f32.xlu0 %v274
    %v276 = vpop.xlane.xlu0 %275
    %v277 = vsel %vm150, %v128, 0.0
    %278 = vadd.xlane.f32.xlu0 %v277
    %v279 = vpop.xlane.xlu0 %278
    %v280 = vsel %vm150, %v129, 0.0
    %281 = vadd.xlane.f32.xlu0 %v280
    %v282 = vpop.xlane.xlu0 %281
    %v283 = vsel %vm150, %v130, 0.0
    %284 = vadd.xlane.f32.xlu0 %v283
    %v285 = vpop.xlane.xlu0 %284
    %v286 = vsel %vm150, %v131, 0.0
    %287 = vadd.xlane.f32.xlu0 %v286
    %v288 = vpop.xlane.xlu0 %287
    %v289 = vsel %vm150, %v132, 0.0
    %290 = vadd.xlane.f32.xlu0 %v289
    %v291 = vpop.xlane.xlu0 %290
    %v292 = vsel %vm150, %v133, 0.0
    %293 = vadd.xlane.f32.xlu0 %v292
    %v294 = vpop.xlane.xlu0 %293
    %v295 = vsel %vm150, %v134, 0.0
    %296 = vadd.xlane.f32.xlu0 %v295
    %v297 = vpop.xlane.xlu0 %296
    %v298 = vsel %vm150, %v135, 0.0
    %299 = vadd.xlane.f32.xlu0 %v298
    %v300 = vpop.xlane.xlu0 %299
    %v301 = vsel %vm150, %v136, 0.0
    %302 = vadd.xlane.f32.xlu0 %v301
    %v303 = vpop.xlane.xlu0 %302
    %v304 = vsel %vm150, %v137, 0.0
    %305 = vadd.xlane.f32.xlu0 %v304
    %v306 = vpop.xlane.xlu0 %305
    %v307 = vsel %vm150, %v138, 0.0
    %308 = vadd.xlane.f32.xlu0 %v307
    %v309 = vpop.xlane.xlu0 %308
    %v310 = vsel %vm150, %v139, 0.0
    %311 = vadd.xlane.f32.xlu0 %v310
    %v312 = vpop.xlane.xlu0 %311
    %v313 = vsel %vm150, %v140, 0.0
    %314 = vadd.xlane.f32.xlu0 %v313
    %v315 = vpop.xlane.xlu0 %314
    %v316 = vsel %vm150, %v141, 0.0
    %317 = vadd.xlane.f32.xlu0 %v316
    %v318 = vpop.xlane.xlu0 %317
    %v319 = vsel %vm150, %v142, 0.0
    %320 = vadd.xlane.f32.xlu0 %v319
    %v321 = vpop.xlane.xlu0 %320
    %v322 = vsel %vm150, %v143, 0.0
    %323 = vadd.xlane.f32.xlu0 %v322
    %v324 = vpop.xlane.xlu0 %323
    %v325 = vsel %vm150, %v144, 0.0
    %326 = vadd.xlane.f32.xlu0 %v325
    %v327 = vpop.xlane.xlu0 %326
    %v328 = vsel %vm150, %v145, 0.0
    %329 = vadd.xlane.f32.xlu0 %v328
    %v330 = vpop.xlane.xlu0 %329
    %v331 = vsel %vm150, %v146, 0.0
    %332 = vadd.xlane.f32.xlu0 %v331
    %v333 = vpop.xlane.xlu0 %332
    %v334 = vsel %vm150, %v147, 0.0
    %335 = vadd.xlane.f32.xlu0 %v334
    %v336 = vpop.xlane.xlu0 %335
    %v337 = vsel %vm150, %v148, 0.0
    %338 = vadd.xlane.f32.xlu0 %v337
    %v339 = vpop.xlane.xlu0 %338
    %v340 = vsel %vm150, %v149, 0.0
    %341 = vadd.xlane.f32.xlu0 %v340
    %v342 = vpop.xlane.xlu0 %341
    %v343 = vrcp.pop 49.0
    %v344 = vmul.f32 49.0, %v343
    %v345 = vsub.f32 1.0, %v344
    %v346 = vmul.f32 %v343, %v345
    %v347 = vadd.f32 %v343, %v346
    %vm348 = vweird.f32 %v343
    %v349 = vsel %vm348, %v343, %v347
    %v350 = vmul.f32 %v153, %v349
    %v351 = vmul.f32 %v156, %v349
    %v352 = vmul.f32 %v159, %v349
    %v353 = vmul.f32 %v162, %v349
    %v354 = vmul.f32 %v165, %v349
    %v355 = vmul.f32 %v168, %v349
    %v356 = vmul.f32 %v171, %v349
    %v357 = vmul.f32 %v174, %v349
    %v358 = vmul.f32 %v177, %v349
    %v359 = vmul.f32 %v180, %v349
    %v360 = vmul.f32 %v183, %v349
    %v361 = vmul.f32 %v186, %v349
    %v362 = vmul.f32 %v189, %v349
    %v363 = vmul.f32 %v192, %v349
    %v364 = vmul.f32 %v195, %v349
    %v365 = vmul.f32 %v198, %v349
    %v366 = vmul.f32 %v201, %v349
    %v367 = vmul.f32 %v204, %v349
    %v368 = vmul.f32 %v207, %v349
    %v369 = vmul.f32 %v210, %v349
    %v370 = vmul.f32 %v213, %v349
    %v371 = vmul.f32 %v216, %v349
    %v372 = vmul.f32 %v219, %v349
    %v373 = vmul.f32 %v222, %v349
    %v374 = vmul.f32 %v225, %v349
    %v375 = vmul.f32 %v228, %v349
    %v376 = vmul.f32 %v231, %v349
    %v377 = vmul.f32 %v234, %v349
    %v378 = vmul.f32 %v237, %v349
    %v379 = vmul.f32 %v240, %v349
    %v380 = vmul.f32 %v243, %v349
    %v381 = vmul.f32 %v246, %v349
    %v382 = vmul.f32 %v249, %v349
    %v383 = vmul.f32 %v252, %v349
    %v384 = vmul.f32 %v255, %v349
    %v385 = vmul.f32 %v258, %v349
    %v386 = vmul.f32 %v261, %v349
    %v387 = vmul.f32 %v264, %v349
    %v388 = vmul.f32 %v267, %v349
    %v389 = vmul.f32 %v270, %v349
    %v390 = vmul.f32 %v273, %v349
    %v391 = vmul.f32 %v276, %v349
    %v392 = vmul.f32 %v279, %v349
    %v393 = vmul.f32 %v282, %v349
    %v394 = vmul.f32 %v285, %v349
    %v395 = vmul.f32 %v288, %v349
    %v396 = vmul.f32 %v291, %v349
    %v397 = vmul.f32 %v294, %v349
    %v398 = vmul.f32 %v297, %v349
    %v399 = vmul.f32 %v300, %v349
    %v400 = vmul.f32 %v303, %v349
    %v401 = vmul.f32 %v306, %v349
    %v402 = vmul.f32 %v309, %v349
    %v403 = vmul.f32 %v312, %v349
    %v404 = vmul.f32 %v315, %v349
    %v405 = vmul.f32 %v318, %v349
    %v406 = vmul.f32 %v321, %v349
    %v407 = vmul.f32 %v324, %v349
    %v408 = vmul.f32 %v327, %v349
    %v409 = vmul.f32 %v330, %v349
    %v410 = vmul.f32 %v333, %v349
    %v411 = vmul.f32 %v336, %v349
    %v412 = vmul.f32 %v339, %v349
    %v413 = vmul.f32 %v342, %v349
    %v414 = vsub.f32 %v86, %v350
    %v415 = vsub.f32 %v87, %v351
    %v416 = vsub.f32 %v88, %v352
    %v417 = vsub.f32 %v89, %v353
    %v418 = vsub.f32 %v90, %v354
    %v419 = vsub.f32 %v91, %v355
    %v420 = vsub.f32 %v92, %v356
    %v421 = vsub.f32 %v93, %v357
    %v422 = vsub.f32 %v94, %v358
    %v423 = vsub.f32 %v95, %v359
    %v424 = vsub.f32 %v96, %v360
    %v425 = vsub.f32 %v97, %v361
    %v426 = vsub.f32 %v98, %v362
    %v427 = vsub.f32 %v99, %v363
    %v428 = vsub.f32 %v100, %v364
    %v429 = vsub.f32 %v101, %v365
    %v430 = vsub.f32 %v102, %v366
    %v431 = vsub.f32 %v103, %v367
    %v432 = vsub.f32 %v104, %v368
    %v433 = vsub.f32 %v105, %v369
    %v434 = vsub.f32 %v106, %v370
    %v435 = vsub.f32 %v107, %v371
    %v436 = vsub.f32 %v108, %v372
    %v437 = vsub.f32 %v109, %v373
    %v438 = vsub.f32 %v110, %v374
    %v439 = vsub.f32 %v111, %v375
    %v440 = vsub.f32 %v112, %v376
    %v441 = vsub.f32 %v113, %v377
    %v442 = vsub.f32 %v114, %v378
    %v443 = vsub.f32 %v115, %v379
    %v444 = vsub.f32 %v116, %v380
    %v445 = vsub.f32 %v117, %v381
    %v446 = vsub.f32 %v118, %v382
    %v447 = vsub.f32 %v119, %v383
    %v448 = vsub.f32 %v120, %v384
    %v449 = vsub.f32 %v121, %v385
    %v450 = vsub.f32 %v122, %v386
    %v451 = vsub.f32 %v123, %v387
    %v452 = vsub.f32 %v124, %v388
    %v453 = vsub.f32 %v125, %v389
    %v454 = vsub.f32 %v126, %v390
    %v455 = vsub.f32 %v127, %v391
    %v456 = vsub.f32 %v128, %v392
    %v457 = vsub.f32 %v129, %v393
    %v458 = vsub.f32 %v130, %v394
    %v459 = vsub.f32 %v131, %v395
    %v460 = vsub.f32 %v132, %v396
    %v461 = vsub.f32 %v133, %v397
    %v462 = vsub.f32 %v134, %v398
    %v463 = vsub.f32 %v135, %v399
    %v464 = vsub.f32 %v136, %v400
    %v465 = vsub.f32 %v137, %v401
    %v466 = vsub.f32 %v138, %v402
    %v467 = vsub.f32 %v139, %v403
    %v468 = vsub.f32 %v140, %v404
    %v469 = vsub.f32 %v141, %v405
    %v470 = vsub.f32 %v142, %v406
    %v471 = vsub.f32 %v143, %v407
    %v472 = vsub.f32 %v144, %v408
    %v473 = vsub.f32 %v145, %v409
    %v474 = vsub.f32 %v146, %v410
    %v475 = vsub.f32 %v147, %v411
    %v476 = vsub.f32 %v148, %v412
    %v477 = vsub.f32 %v149, %v413
    %v478 = vmul.f32 %v414, %v414
    %v479 = vmul.f32 %v415, %v415
    %v480 = vmul.f32 %v416, %v416
    %v481 = vmul.f32 %v417, %v417
    %v482 = vmul.f32 %v418, %v418
    %v483 = vmul.f32 %v419, %v419
    %v484 = vmul.f32 %v420, %v420
    %v485 = vmul.f32 %v421, %v421
    %v486 = vmul.f32 %v422, %v422
    %v487 = vmul.f32 %v423, %v423
    %v488 = vmul.f32 %v424, %v424
    %v489 = vmul.f32 %v425, %v425
    %v490 = vmul.f32 %v426, %v426
    %v491 = vmul.f32 %v427, %v427
    %v492 = vmul.f32 %v428, %v428
    %v493 = vmul.f32 %v429, %v429
    %v494 = vmul.f32 %v430, %v430
    %v495 = vmul.f32 %v431, %v431
    %v496 = vmul.f32 %v432, %v432
    %v497 = vmul.f32 %v433, %v433
    %v498 = vmul.f32 %v434, %v434
    %v499 = vmul.f32 %v435, %v435
    %v500 = vmul.f32 %v436, %v436
    %v501 = vmul.f32 %v437, %v437
    %v502 = vmul.f32 %v438, %v438
    %v503 = vmul.f32 %v439, %v439
    %v504 = vmul.f32 %v440, %v440
    %v505 = vmul.f32 %v441, %v441
    %v506 = vmul.f32 %v442, %v442
    %v507 = vmul.f32 %v443, %v443
    %v508 = vmul.f32 %v444, %v444
    %v509 = vmul.f32 %v445, %v445
    %v510 = vmul.f32 %v446, %v446
    %v511 = vmul.f32 %v447, %v447
    %v512 = vmul.f32 %v448, %v448
    %v513 = vmul.f32 %v449, %v449
    %v514 = vmul.f32 %v450, %v450
    %v515 = vmul.f32 %v451, %v451
    %v516 = vmul.f32 %v452, %v452
    %v517 = vmul.f32 %v453, %v453
    %v518 = vmul.f32 %v454, %v454
    %v519 = vmul.f32 %v455, %v455
    %v520 = vmul.f32 %v456, %v456
    %v521 = vmul.f32 %v457, %v457
    %v522 = vmul.f32 %v458, %v458
    %v523 = vmul.f32 %v459, %v459
    %v524 = vmul.f32 %v460, %v460
    %v525 = vmul.f32 %v461, %v461
    %v526 = vmul.f32 %v462, %v462
    %v527 = vmul.f32 %v463, %v463
    %v528 = vmul.f32 %v464, %v464
    %v529 = vmul.f32 %v465, %v465
    %v530 = vmul.f32 %v466, %v466
    %v531 = vmul.f32 %v467, %v467
    %v532 = vmul.f32 %v468, %v468
    %v533 = vmul.f32 %v469, %v469
    %v534 = vmul.f32 %v470, %v470
    %v535 = vmul.f32 %v471, %v471
    %v536 = vmul.f32 %v472, %v472
    %v537 = vmul.f32 %v473, %v473
    %v538 = vmul.f32 %v474, %v474
    %v539 = vmul.f32 %v475, %v475
    %v540 = vmul.f32 %v476, %v476
    %v541 = vmul.f32 %v477, %v477
    %v542 = vsel %vm150, %v478, 0.0
    %543 = vadd.xlane.f32.xlu0 %v542
    %v544 = vpop.xlane.xlu0 %543
    %v545 = vsel %vm150, %v479, 0.0
    %546 = vadd.xlane.f32.xlu0 %v545
    %v547 = vpop.xlane.xlu0 %546
    %v548 = vsel %vm150, %v480, 0.0
    %549 = vadd.xlane.f32.xlu0 %v548
    %v550 = vpop.xlane.xlu0 %549
    %v551 = vsel %vm150, %v481, 0.0
    %552 = vadd.xlane.f32.xlu0 %v551
    %v553 = vpop.xlane.xlu0 %552
    %v554 = vsel %vm150, %v482, 0.0
    %555 = vadd.xlane.f32.xlu0 %v554
    %v556 = vpop.xlane.xlu0 %555
    %v557 = vsel %vm150, %v483, 0.0
    %558 = vadd.xlane.f32.xlu0 %v557
    %v559 = vpop.xlane.xlu0 %558
    %v560 = vsel %vm150, %v484, 0.0
    %561 = vadd.xlane.f32.xlu0 %v560
    %v562 = vpop.xlane.xlu0 %561
    %v563 = vsel %vm150, %v485, 0.0
    %564 = vadd.xlane.f32.xlu0 %v563
    %v565 = vpop.xlane.xlu0 %564
    %v566 = vsel %vm150, %v486, 0.0
    %567 = vadd.xlane.f32.xlu0 %v566
    %v568 = vpop.xlane.xlu0 %567
    %v569 = vsel %vm150, %v487, 0.0
    %570 = vadd.xlane.f32.xlu0 %v569
    %v571 = vpop.xlane.xlu0 %570
    %v572 = vsel %vm150, %v488, 0.0
    %573 = vadd.xlane.f32.xlu0 %v572
    %v574 = vpop.xlane.xlu0 %573
    %v575 = vsel %vm150, %v489, 0.0
    %576 = vadd.xlane.f32.xlu0 %v575
    %v577 = vpop.xlane.xlu0 %576
    %v578 = vsel %vm150, %v490, 0.0
    %579 = vadd.xlane.f32.xlu0 %v578
    %v580 = vpop.xlane.xlu0 %579
    %v581 = vsel %vm150, %v491, 0.0
    %582 = vadd.xlane.f32.xlu0 %v581
    %v583 = vpop.xlane.xlu0 %582
    %v584 = vsel %vm150, %v492, 0.0
    %585 = vadd.xlane.f32.xlu0 %v584
    %v586 = vpop.xlane.xlu0 %585
    %v587 = vsel %vm150, %v493, 0.0
    %588 = vadd.xlane.f32.xlu0 %v587
    %v589 = vpop.xlane.xlu0 %588
    %v590 = vsel %vm150, %v494, 0.0
    %591 = vadd.xlane.f32.xlu0 %v590
    %v592 = vpop.xlane.xlu0 %591
    %v593 = vsel %vm150, %v495, 0.0
    %594 = vadd.xlane.f32.xlu0 %v593
    %v595 = vpop.xlane.xlu0 %594
    %v596 = vsel %vm150, %v496, 0.0
    %597 = vadd.xlane.f32.xlu0 %v596
    %v598 = vpop.xlane.xlu0 %597
    %v599 = vsel %vm150, %v497, 0.0
    %600 = vadd.xlane.f32.xlu0 %v599
    %v601 = vpop.xlane.xlu0 %600
    %v602 = vsel %vm150, %v498, 0.0
    %603 = vadd.xlane.f32.xlu0 %v602
    %v604 = vpop.xlane.xlu0 %603
    %v605 = vsel %vm150, %v499, 0.0
    %606 = vadd.xlane.f32.xlu0 %v605
    %v607 = vpop.xlane.xlu0 %606
    %v608 = vsel %vm150, %v500, 0.0
    %609 = vadd.xlane.f32.xlu0 %v608
    %v610 = vpop.xlane.xlu0 %609
    %v611 = vsel %vm150, %v501, 0.0
    %612 = vadd.xlane.f32.xlu0 %v611
    %v613 = vpop.xlane.xlu0 %612
    %v614 = vsel %vm150, %v502, 0.0
    %615 = vadd.xlane.f32.xlu0 %v614
    %v616 = vpop.xlane.xlu0 %615
    %v617 = vsel %vm150, %v503, 0.0
    %618 = vadd.xlane.f32.xlu0 %v617
    %v619 = vpop.xlane.xlu0 %618
    %v620 = vsel %vm150, %v504, 0.0
    %621 = vadd.xlane.f32.xlu0 %v620
    %v622 = vpop.xlane.xlu0 %621
    %v623 = vsel %vm150, %v505, 0.0
    %624 = vadd.xlane.f32.xlu0 %v623
    %v625 = vpop.xlane.xlu0 %624
    %v626 = vsel %vm150, %v506, 0.0
    %627 = vadd.xlane.f32.xlu0 %v626
    %v628 = vpop.xlane.xlu0 %627
    %v629 = vsel %vm150, %v507, 0.0
    %630 = vadd.xlane.f32.xlu0 %v629
    %v631 = vpop.xlane.xlu0 %630
    %v632 = vsel %vm150, %v508, 0.0
    %633 = vadd.xlane.f32.xlu0 %v632
    %v634 = vpop.xlane.xlu0 %633
    %v635 = vsel %vm150, %v509, 0.0
    %636 = vadd.xlane.f32.xlu0 %v635
    %v637 = vpop.xlane.xlu0 %636
    %v638 = vsel %vm150, %v510, 0.0
    %639 = vadd.xlane.f32.xlu0 %v638
    %v640 = vpop.xlane.xlu0 %639
    %v641 = vsel %vm150, %v511, 0.0
    %642 = vadd.xlane.f32.xlu0 %v641
    %v643 = vpop.xlane.xlu0 %642
    %v644 = vsel %vm150, %v512, 0.0
    %645 = vadd.xlane.f32.xlu0 %v644
    %v646 = vpop.xlane.xlu0 %645
    %v647 = vsel %vm150, %v513, 0.0
    %648 = vadd.xlane.f32.xlu0 %v647
    %v649 = vpop.xlane.xlu0 %648
    %v650 = vsel %vm150, %v514, 0.0
    %651 = vadd.xlane.f32.xlu0 %v650
    %v652 = vpop.xlane.xlu0 %651
    %v653 = vsel %vm150, %v515, 0.0
    %654 = vadd.xlane.f32.xlu0 %v653
    %v655 = vpop.xlane.xlu0 %654
    %v656 = vsel %vm150, %v516, 0.0
    %657 = vadd.xlane.f32.xlu0 %v656
    %v658 = vpop.xlane.xlu0 %657
    %v659 = vsel %vm150, %v517, 0.0
    %660 = vadd.xlane.f32.xlu0 %v659
    %v661 = vpop.xlane.xlu0 %660
    %v662 = vsel %vm150, %v518, 0.0
    %663 = vadd.xlane.f32.xlu0 %v662
    %v664 = vpop.xlane.xlu0 %663
    %v665 = vsel %vm150, %v519, 0.0
    %666 = vadd.xlane.f32.xlu0 %v665
    %v667 = vpop.xlane.xlu0 %666
    %v668 = vsel %vm150, %v520, 0.0
    %669 = vadd.xlane.f32.xlu0 %v668
    %v670 = vpop.xlane.xlu0 %669
    %v671 = vsel %vm150, %v521, 0.0
    %672 = vadd.xlane.f32.xlu0 %v671
    %v673 = vpop.xlane.xlu0 %672
    %v674 = vsel %vm150, %v522, 0.0
    %675 = vadd.xlane.f32.xlu0 %v674
    %v676 = vpop.xlane.xlu0 %675
    %v677 = vsel %vm150, %v523, 0.0
    %678 = vadd.xlane.f32.xlu0 %v677
    %v679 = vpop.xlane.xlu0 %678
    %v680 = vsel %vm150, %v524, 0.0
    %681 = vadd.xlane.f32.xlu0 %v680
    %v682 = vpop.xlane.xlu0 %681
    %v683 = vsel %vm150, %v525, 0.0
    %684 = vadd.xlane.f32.xlu0 %v683
    %v685 = vpop.xlane.xlu0 %684
    %v686 = vsel %vm150, %v526, 0.0
    %687 = vadd.xlane.f32.xlu0 %v686
    %v688 = vpop.xlane.xlu0 %687
    %v689 = vsel %vm150, %v527, 0.0
    %690 = vadd.xlane.f32.xlu0 %v689
    %v691 = vpop.xlane.xlu0 %690
    %v692 = vsel %vm150, %v528, 0.0
    %693 = vadd.xlane.f32.xlu0 %v692
    %v694 = vpop.xlane.xlu0 %693
    %v695 = vsel %vm150, %v529, 0.0
    %696 = vadd.xlane.f32.xlu0 %v695
    %v697 = vpop.xlane.xlu0 %696
    %v698 = vsel %vm150, %v530, 0.0
    %699 = vadd.xlane.f32.xlu0 %v698
    %v700 = vpop.xlane.xlu0 %699
    %v701 = vsel %vm150, %v531, 0.0
    %702 = vadd.xlane.f32.xlu0 %v701
    %v703 = vpop.xlane.xlu0 %702
    %v704 = vsel %vm150, %v532, 0.0
    %705 = vadd.xlane.f32.xlu0 %v704
    %v706 = vpop.xlane.xlu0 %705
    %v707 = vsel %vm150, %v533, 0.0
    %708 = vadd.xlane.f32.xlu0 %v707
    %v709 = vpop.xlane.xlu0 %708
    %v710 = vsel %vm150, %v534, 0.0
    %711 = vadd.xlane.f32.xlu0 %v710
    %v712 = vpop.xlane.xlu0 %711
    %v713 = vsel %vm150, %v535, 0.0
    %714 = vadd.xlane.f32.xlu0 %v713
    %v715 = vpop.xlane.xlu0 %714
    %v716 = vsel %vm150, %v536, 0.0
    %717 = vadd.xlane.f32.xlu0 %v716
    %v718 = vpop.xlane.xlu0 %717
    %v719 = vsel %vm150, %v537, 0.0
    %720 = vadd.xlane.f32.xlu0 %v719
    %v721 = vpop.xlane.xlu0 %720
    %v722 = vsel %vm150, %v538, 0.0
    %723 = vadd.xlane.f32.xlu0 %v722
    %v724 = vpop.xlane.xlu0 %723
    %v725 = vsel %vm150, %v539, 0.0
    %726 = vadd.xlane.f32.xlu0 %v725
    %v727 = vpop.xlane.xlu0 %726
    %v728 = vsel %vm150, %v540, 0.0
    %729 = vadd.xlane.f32.xlu0 %v728
    %v730 = vpop.xlane.xlu0 %729
    %v731 = vsel %vm150, %v541, 0.0
    %732 = vadd.xlane.f32.xlu0 %v731
    %v733 = vpop.xlane.xlu0 %732
    %v734 = vmul.f32 %v544, 0.020408163
    %v735 = vmul.f32 %v547, 0.020408163
    %v736 = vmul.f32 %v550, 0.020408163
    %v737 = vmul.f32 %v553, 0.020408163
    %v738 = vmul.f32 %v556, 0.020408163
    %v739 = vmul.f32 %v559, 0.020408163
    %v740 = vmul.f32 %v562, 0.020408163
    %v741 = vmul.f32 %v565, 0.020408163
    %v742 = vmul.f32 %v568, 0.020408163
    %v743 = vmul.f32 %v571, 0.020408163
    %v744 = vmul.f32 %v574, 0.020408163
    %v745 = vmul.f32 %v577, 0.020408163
    %v746 = vmul.f32 %v580, 0.020408163
    %v747 = vmul.f32 %v583, 0.020408163
    %v748 = vmul.f32 %v586, 0.020408163
    %v749 = vmul.f32 %v589, 0.020408163
    %v750 = vmul.f32 %v592, 0.020408163
    %v751 = vmul.f32 %v595, 0.020408163
    %v752 = vmul.f32 %v598, 0.020408163
    %v753 = vmul.f32 %v601, 0.020408163
    %v754 = vmul.f32 %v604, 0.020408163
    %v755 = vmul.f32 %v607, 0.020408163
    %v756 = vmul.f32 %v610, 0.020408163
    %v757 = vmul.f32 %v613, 0.020408163
    %v758 = vmul.f32 %v616, 0.020408163
    %v759 = vmul.f32 %v619, 0.020408163
    %v760 = vmul.f32 %v622, 0.020408163
    %v761 = vmul.f32 %v625, 0.020408163
    %v762 = vmul.f32 %v628, 0.020408163
    %v763 = vmul.f32 %v631, 0.020408163
    %v764 = vmul.f32 %v634, 0.020408163
    %v765 = vmul.f32 %v637, 0.020408163
    %v766 = vmul.f32 %v640, 0.020408163
    %v767 = vmul.f32 %v643, 0.020408163
    %v768 = vmul.f32 %v646, 0.020408163
    %v769 = vmul.f32 %v649, 0.020408163
    %v770 = vmul.f32 %v652, 0.020408163
    %v771 = vmul.f32 %v655, 0.020408163
    %v772 = vmul.f32 %v658, 0.020408163
    %v773 = vmul.f32 %v661, 0.020408163
    %v774 = vmul.f32 %v664, 0.020408163
    %v775 = vmul.f32 %v667, 0.020408163
    %v776 = vmul.f32 %v670, 0.020408163
    %v777 = vmul.f32 %v673, 0.020408163
    %v778 = vmul.f32 %v676, 0.020408163
    %v779 = vmul.f32 %v679, 0.020408163
    %v780 = vmul.f32 %v682, 0.020408163
    %v781 = vmul.f32 %v685, 0.020408163
    %v782 = vmul.f32 %v688, 0.020408163
    %v783 = vmul.f32 %v691, 0.020408163
    %v784 = vmul.f32 %v694, 0.020408163
    %v785 = vmul.f32 %v697, 0.020408163
    %v786 = vmul.f32 %v700, 0.020408163
    %v787 = vmul.f32 %v703, 0.020408163
    %v788 = vmul.f32 %v706, 0.020408163
    %v789 = vmul.f32 %v709, 0.020408163
    %v790 = vmul.f32 %v712, 0.020408163
    %v791 = vmul.f32 %v715, 0.020408163
    %v792 = vmul.f32 %v718, 0.020408163
    %v793 = vmul.f32 %v721, 0.020408163
    %v794 = vmul.f32 %v724, 0.020408163
    %v795 = vmul.f32 %v727, 0.020408163
    %v796 = vmul.f32 %v730, 0.020408163
    %v797 = vmul.f32 %v733, 0.020408163
    %v798 = vadd.f32 %v734, 1e-05
    %v799 = vadd.f32 %v735, 1e-05
    %v800 = vadd.f32 %v736, 1e-05
    %v801 = vadd.f32 %v737, 1e-05
    %v802 = vadd.f32 %v738, 1e-05
    %v803 = vadd.f32 %v739, 1e-05
    %v804 = vadd.f32 %v740, 1e-05
    %v805 = vadd.f32 %v741, 1e-05
    %v806 = vadd.f32 %v742, 1e-05
    %v807 = vadd.f32 %v743, 1e-05
    %v808 = vadd.f32 %v744, 1e-05
    %v809 = vadd.f32 %v745, 1e-05
    %v810 = vadd.f32 %v746, 1e-05
    %v811 = vadd.f32 %v747, 1e-05
    %v812 = vadd.f32 %v748, 1e-05
    %v813 = vadd.f32 %v749, 1e-05
    %v814 = vadd.f32 %v750, 1e-05
    %v815 = vadd.f32 %v751, 1e-05
    %v816 = vadd.f32 %v752, 1e-05
    %v817 = vadd.f32 %v753, 1e-05
    %v818 = vadd.f32 %v754, 1e-05
    %v819 = vadd.f32 %v755, 1e-05
    %v820 = vadd.f32 %v756, 1e-05
    %v821 = vadd.f32 %v757, 1e-05
    %v822 = vadd.f32 %v758, 1e-05
    %v823 = vadd.f32 %v759, 1e-05
    %v824 = vadd.f32 %v760, 1e-05
    %v825 = vadd.f32 %v761, 1e-05
    %v826 = vadd.f32 %v762, 1e-05
    %v827 = vadd.f32 %v763, 1e-05
    %v828 = vadd.f32 %v764, 1e-05
    %v829 = vadd.f32 %v765, 1e-05
    %v830 = vadd.f32 %v766, 1e-05
    %v831 = vadd.f32 %v767, 1e-05
    %v832 = vadd.f32 %v768, 1e-05
    %v833 = vadd.f32 %v769, 1e-05
    %v834 = vadd.f32 %v770, 1e-05
    %v835 = vadd.f32 %v771, 1e-05
    %v836 = vadd.f32 %v772, 1e-05
    %v837 = vadd.f32 %v773, 1e-05
    %v838 = vadd.f32 %v774, 1e-05
    %v839 = vadd.f32 %v775, 1e-05
    %v840 = vadd.f32 %v776, 1e-05
    %v841 = vadd.f32 %v777, 1e-05
    %v842 = vadd.f32 %v778, 1e-05
    %v843 = vadd.f32 %v779, 1e-05
    %v844 = vadd.f32 %v780, 1e-05
    %v845 = vadd.f32 %v781, 1e-05
    %v846 = vadd.f32 %v782, 1e-05
    %v847 = vadd.f32 %v783, 1e-05
    %v848 = vadd.f32 %v784, 1e-05
    %v849 = vadd.f32 %v785, 1e-05
    %v850 = vadd.f32 %v786, 1e-05
    %v851 = vadd.f32 %v787, 1e-05
    %v852 = vadd.f32 %v788, 1e-05
    %v853 = vadd.f32 %v789, 1e-05
    %v854 = vadd.f32 %v790, 1e-05
    %v855 = vadd.f32 %v791, 1e-05
    %v856 = vadd.f32 %v792, 1e-05
    %v857 = vadd.f32 %v793, 1e-05
    %v858 = vadd.f32 %v794, 1e-05
    %v859 = vadd.f32 %v795, 1e-05
    %v860 = vadd.f32 %v796, 1e-05
    %v861 = vadd.f32 %v797, 1e-05
    %v862 = vrsqrt.pop %v798
    %v863 = vmul.f32 %v862, %v798
    %v864 = vmul.f32 %v863, %v862
    %v865 = vmul.f32 0.5, %v864
    %v866 = vsub.f32 1.5, %v865
    %v867 = vmul.f32 %v862, %v866
    %vm868 = vweird.f32 %v798
    %vm869 = vweird.f32 %v862
    %vm870 = vmor %vm868, %vm869
    %v871 = vsel %vm870, %v862, %v867
    %v872 = vrsqrt.pop %v799
    %v873 = vmul.f32 %v872, %v799
    %v874 = vmul.f32 %v873, %v872
    %v875 = vmul.f32 0.5, %v874
    %v876 = vsub.f32 1.5, %v875
    %v877 = vmul.f32 %v872, %v876
    %vm878 = vweird.f32 %v799
    %vm879 = vweird.f32 %v872
    %vm880 = vmor %vm878, %vm879
    %v881 = vsel %vm880, %v872, %v877
    %v882 = vrsqrt.pop %v800
    %v883 = vmul.f32 %v882, %v800
    %v884 = vmul.f32 %v883, %v882
    %v885 = vmul.f32 0.5, %v884
    %v886 = vsub.f32 1.5, %v885
    %v887 = vmul.f32 %v882, %v886
    %vm888 = vweird.f32 %v800
    %vm889 = vweird.f32 %v882
    %vm890 = vmor %vm888, %vm889
    %v891 = vsel %vm890, %v882, %v887
    %v892 = vrsqrt.pop %v801
    %v893 = vmul.f32 %v892, %v801
    %v894 = vmul.f32 %v893, %v892
    %v895 = vmul.f32 0.5, %v894
    %v896 = vsub.f32 1.5, %v895
    %v897 = vmul.f32 %v892, %v896
    %vm898 = vweird.f32 %v801
    %vm899 = vweird.f32 %v892
    %vm900 = vmor %vm898, %vm899
    %v901 = vsel %vm900, %v892, %v897
    %v902 = vrsqrt.pop %v802
    %v903 = vmul.f32 %v902, %v802
    %v904 = vmul.f32 %v903, %v902
    %v905 = vmul.f32 0.5, %v904
    %v906 = vsub.f32 1.5, %v905
    %v907 = vmul.f32 %v902, %v906
    %vm908 = vweird.f32 %v802
    %vm909 = vweird.f32 %v902
    %vm910 = vmor %vm908, %vm909
    %v911 = vsel %vm910, %v902, %v907
    %v912 = vrsqrt.pop %v803
    %v913 = vmul.f32 %v912, %v803
    %v914 = vmul.f32 %v913, %v912
    %v915 = vmul.f32 0.5, %v914
    %v916 = vsub.f32 1.5, %v915
    %v917 = vmul.f32 %v912, %v916
    %vm918 = vweird.f32 %v803
    %vm919 = vweird.f32 %v912
    %vm920 = vmor %vm918, %vm919
    %v921 = vsel %vm920, %v912, %v917
    %v922 = vrsqrt.pop %v804
    %v923 = vmul.f32 %v922, %v804
    %v924 = vmul.f32 %v923, %v922
    %v925 = vmul.f32 0.5, %v924
    %v926 = vsub.f32 1.5, %v925
    %v927 = vmul.f32 %v922, %v926
    %vm928 = vweird.f32 %v804
    %vm929 = vweird.f32 %v922
    %vm930 = vmor %vm928, %vm929
    %v931 = vsel %vm930, %v922, %v927
    %v932 = vrsqrt.pop %v805
    %v933 = vmul.f32 %v932, %v805
    %v934 = vmul.f32 %v933, %v932
    %v935 = vmul.f32 0.5, %v934
    %v936 = vsub.f32 1.5, %v935
    %v937 = vmul.f32 %v932, %v936
    %vm938 = vweird.f32 %v805
    %vm939 = vweird.f32 %v932
    %vm940 = vmor %vm938, %vm939
    %v941 = vsel %vm940, %v932, %v937
    %v942 = vrsqrt.pop %v806
    %v943 = vmul.f32 %v942, %v806
    %v944 = vmul.f32 %v943, %v942
    %v945 = vmul.f32 0.5, %v944
    %v946 = vsub.f32 1.5, %v945
    %v947 = vmul.f32 %v942, %v946
    %vm948 = vweird.f32 %v806
    %vm949 = vweird.f32 %v942
    %vm950 = vmor %vm948, %vm949
    %v951 = vsel %vm950, %v942, %v947
    %v952 = vrsqrt.pop %v807
    %v953 = vmul.f32 %v952, %v807
    %v954 = vmul.f32 %v953, %v952
    %v955 = vmul.f32 0.5, %v954
    %v956 = vsub.f32 1.5, %v955
    %v957 = vmul.f32 %v952, %v956
    %vm958 = vweird.f32 %v807
    %vm959 = vweird.f32 %v952
    %vm960 = vmor %vm958, %vm959
    %v961 = vsel %vm960, %v952, %v957
    %v962 = vrsqrt.pop %v808
    %v963 = vmul.f32 %v962, %v808
    %v964 = vmul.f32 %v963, %v962
    %v965 = vmul.f32 0.5, %v964
    %v966 = vsub.f32 1.5, %v965
    %v967 = vmul.f32 %v962, %v966
    %vm968 = vweird.f32 %v808
    %vm969 = vweird.f32 %v962
    %vm970 = vmor %vm968, %vm969
    %v971 = vsel %vm970, %v962, %v967
    %v972 = vrsqrt.pop %v809
    %v973 = vmul.f32 %v972, %v809
    %v974 = vmul.f32 %v973, %v972
    %v975 = vmul.f32 0.5, %v974
    %v976 = vsub.f32 1.5, %v975
    %v977 = vmul.f32 %v972, %v976
    %vm978 = vweird.f32 %v809
    %vm979 = vweird.f32 %v972
    %vm980 = vmor %vm978, %vm979
    %v981 = vsel %vm980, %v972, %v977
    %v982 = vrsqrt.pop %v810
    %v983 = vmul.f32 %v982, %v810
    %v984 = vmul.f32 %v983, %v982
    %v985 = vmul.f32 0.5, %v984
    %v986 = vsub.f32 1.5, %v985
    %v987 = vmul.f32 %v982, %v986
    %vm988 = vweird.f32 %v810
    %vm989 = vweird.f32 %v982
    %vm990 = vmor %vm988, %vm989
    %v991 = vsel %vm990, %v982, %v987
    %v992 = vrsqrt.pop %v811
    %v993 = vmul.f32 %v992, %v811
    %v994 = vmul.f32 %v993, %v992
    %v995 = vmul.f32 0.5, %v994
    %v996 = vsub.f32 1.5, %v995
    %v997 = vmul.f32 %v992, %v996
    %vm998 = vweird.f32 %v811
    %vm999 = vweird.f32 %v992
    %vm1000 = vmor %vm998, %vm999
    %v1001 = vsel %vm1000, %v992, %v997
    %v1002 = vrsqrt.pop %v812
    %v1003 = vmul.f32 %v1002, %v812
    %v1004 = vmul.f32 %v1003, %v1002
    %v1005 = vmul.f32 0.5, %v1004
    %v1006 = vsub.f32 1.5, %v1005
    %v1007 = vmul.f32 %v1002, %v1006
    %vm1008 = vweird.f32 %v812
    %vm1009 = vweird.f32 %v1002
    %vm1010 = vmor %vm1008, %vm1009
    %v1011 = vsel %vm1010, %v1002, %v1007
    %v1012 = vrsqrt.pop %v813
    %v1013 = vmul.f32 %v1012, %v813
    %v1014 = vmul.f32 %v1013, %v1012
    %v1015 = vmul.f32 0.5, %v1014
    %v1016 = vsub.f32 1.5, %v1015
    %v1017 = vmul.f32 %v1012, %v1016
    %vm1018 = vweird.f32 %v813
    %vm1019 = vweird.f32 %v1012
    %vm1020 = vmor %vm1018, %vm1019
    %v1021 = vsel %vm1020, %v1012, %v1017
    %v1022 = vrsqrt.pop %v814
    %v1023 = vmul.f32 %v1022, %v814
    %v1024 = vmul.f32 %v1023, %v1022
    %v1025 = vmul.f32 0.5, %v1024
    %v1026 = vsub.f32 1.5, %v1025
    %v1027 = vmul.f32 %v1022, %v1026
    %vm1028 = vweird.f32 %v814
    %vm1029 = vweird.f32 %v1022
    %vm1030 = vmor %vm1028, %vm1029
    %v1031 = vsel %vm1030, %v1022, %v1027
    %v1032 = vrsqrt.pop %v815
    %v1033 = vmul.f32 %v1032, %v815
    %v1034 = vmul.f32 %v1033, %v1032
    %v1035 = vmul.f32 0.5, %v1034
    %v1036 = vsub.f32 1.5, %v1035
    %v1037 = vmul.f32 %v1032, %v1036
    %vm1038 = vweird.f32 %v815
    %vm1039 = vweird.f32 %v1032
    %vm1040 = vmor %vm1038, %vm1039
    %v1041 = vsel %vm1040, %v1032, %v1037
    %v1042 = vrsqrt.pop %v816
    %v1043 = vmul.f32 %v1042, %v816
    %v1044 = vmul.f32 %v1043, %v1042
    %v1045 = vmul.f32 0.5, %v1044
    %v1046 = vsub.f32 1.5, %v1045
    %v1047 = vmul.f32 %v1042, %v1046
    %vm1048 = vweird.f32 %v816
    %vm1049 = vweird.f32 %v1042
    %vm1050 = vmor %vm1048, %vm1049
    %v1051 = vsel %vm1050, %v1042, %v1047
    %v1052 = vrsqrt.pop %v817
    %v1053 = vmul.f32 %v1052, %v817
    %v1054 = vmul.f32 %v1053, %v1052
    %v1055 = vmul.f32 0.5, %v1054
    %v1056 = vsub.f32 1.5, %v1055
    %v1057 = vmul.f32 %v1052, %v1056
    %vm1058 = vweird.f32 %v817
    %vm1059 = vweird.f32 %v1052
    %vm1060 = vmor %vm1058, %vm1059
    %v1061 = vsel %vm1060, %v1052, %v1057
    %v1062 = vrsqrt.pop %v818
    %v1063 = vmul.f32 %v1062, %v818
    %v1064 = vmul.f32 %v1063, %v1062
    %v1065 = vmul.f32 0.5, %v1064
    %v1066 = vsub.f32 1.5, %v1065
    %v1067 = vmul.f32 %v1062, %v1066
    %vm1068 = vweird.f32 %v818
    %vm1069 = vweird.f32 %v1062
    %vm1070 = vmor %vm1068, %vm1069
    %v1071 = vsel %vm1070, %v1062, %v1067
    %v1072 = vrsqrt.pop %v819
    %v1073 = vmul.f32 %v1072, %v819
    %v1074 = vmul.f32 %v1073, %v1072
    %v1075 = vmul.f32 0.5, %v1074
    %v1076 = vsub.f32 1.5, %v1075
    %v1077 = vmul.f32 %v1072, %v1076
    %vm1078 = vweird.f32 %v819
    %vm1079 = vweird.f32 %v1072
    %vm1080 = vmor %vm1078, %vm1079
    %v1081 = vsel %vm1080, %v1072, %v1077
    %v1082 = vrsqrt.pop %v820
    %v1083 = vmul.f32 %v1082, %v820
    %v1084 = vmul.f32 %v1083, %v1082
    %v1085 = vmul.f32 0.5, %v1084
    %v1086 = vsub.f32 1.5, %v1085
    %v1087 = vmul.f32 %v1082, %v1086
    %vm1088 = vweird.f32 %v820
    %vm1089 = vweird.f32 %v1082
    %vm1090 = vmor %vm1088, %vm1089
    %v1091 = vsel %vm1090, %v1082, %v1087
    %v1092 = vrsqrt.pop %v821
    %v1093 = vmul.f32 %v1092, %v821
    %v1094 = vmul.f32 %v1093, %v1092
    %v1095 = vmul.f32 0.5, %v1094
    %v1096 = vsub.f32 1.5, %v1095
    %v1097 = vmul.f32 %v1092, %v1096
    %vm1098 = vweird.f32 %v821
    %vm1099 = vweird.f32 %v1092
    %vm1100 = vmor %vm1098, %vm1099
    %v1101 = vsel %vm1100, %v1092, %v1097
    %v1102 = vrsqrt.pop %v822
    %v1103 = vmul.f32 %v1102, %v822
    %v1104 = vmul.f32 %v1103, %v1102
    %v1105 = vmul.f32 0.5, %v1104
    %v1106 = vsub.f32 1.5, %v1105
    %v1107 = vmul.f32 %v1102, %v1106
    %vm1108 = vweird.f32 %v822
    %vm1109 = vweird.f32 %v1102
    %vm1110 = vmor %vm1108, %vm1109
    %v1111 = vsel %vm1110, %v1102, %v1107
    %v1112 = vrsqrt.pop %v823
    %v1113 = vmul.f32 %v1112, %v823
    %v1114 = vmul.f32 %v1113, %v1112
    %v1115 = vmul.f32 0.5, %v1114
    %v1116 = vsub.f32 1.5, %v1115
    %v1117 = vmul.f32 %v1112, %v1116
    %vm1118 = vweird.f32 %v823
    %vm1119 = vweird.f32 %v1112
    %vm1120 = vmor %vm1118, %vm1119
    %v1121 = vsel %vm1120, %v1112, %v1117
    %v1122 = vrsqrt.pop %v824
    %v1123 = vmul.f32 %v1122, %v824
    %v1124 = vmul.f32 %v1123, %v1122
    %v1125 = vmul.f32 0.5, %v1124
    %v1126 = vsub.f32 1.5, %v1125
    %v1127 = vmul.f32 %v1122, %v1126
    %vm1128 = vweird.f32 %v824
    %vm1129 = vweird.f32 %v1122
    %vm1130 = vmor %vm1128, %vm1129
    %v1131 = vsel %vm1130, %v1122, %v1127
    %v1132 = vrsqrt.pop %v825
    %v1133 = vmul.f32 %v1132, %v825
    %v1134 = vmul.f32 %v1133, %v1132
    %v1135 = vmul.f32 0.5, %v1134
    %v1136 = vsub.f32 1.5, %v1135
    %v1137 = vmul.f32 %v1132, %v1136
    %vm1138 = vweird.f32 %v825
    %vm1139 = vweird.f32 %v1132
    %vm1140 = vmor %vm1138, %vm1139
    %v1141 = vsel %vm1140, %v1132, %v1137
    %v1142 = vrsqrt.pop %v826
    %v1143 = vmul.f32 %v1142, %v826
    %v1144 = vmul.f32 %v1143, %v1142
    %v1145 = vmul.f32 0.5, %v1144
    %v1146 = vsub.f32 1.5, %v1145
    %v1147 = vmul.f32 %v1142, %v1146
    %vm1148 = vweird.f32 %v826
    %vm1149 = vweird.f32 %v1142
    %vm1150 = vmor %vm1148, %vm1149
    %v1151 = vsel %vm1150, %v1142, %v1147
    %v1152 = vrsqrt.pop %v827
    %v1153 = vmul.f32 %v1152, %v827
    %v1154 = vmul.f32 %v1153, %v1152
    %v1155 = vmul.f32 0.5, %v1154
    %v1156 = vsub.f32 1.5, %v1155
    %v1157 = vmul.f32 %v1152, %v1156
    %vm1158 = vweird.f32 %v827
    %vm1159 = vweird.f32 %v1152
    %vm1160 = vmor %vm1158, %vm1159
    %v1161 = vsel %vm1160, %v1152, %v1157
    %v1162 = vrsqrt.pop %v828
    %v1163 = vmul.f32 %v1162, %v828
    %v1164 = vmul.f32 %v1163, %v1162
    %v1165 = vmul.f32 0.5, %v1164
    %v1166 = vsub.f32 1.5, %v1165
    %v1167 = vmul.f32 %v1162, %v1166
    %vm1168 = vweird.f32 %v828
    %vm1169 = vweird.f32 %v1162
    %vm1170 = vmor %vm1168, %vm1169
    %v1171 = vsel %vm1170, %v1162, %v1167
    %v1172 = vrsqrt.pop %v829
    %v1173 = vmul.f32 %v1172, %v829
    %v1174 = vmul.f32 %v1173, %v1172
    %v1175 = vmul.f32 0.5, %v1174
    %v1176 = vsub.f32 1.5, %v1175
    %v1177 = vmul.f32 %v1172, %v1176
    %vm1178 = vweird.f32 %v829
    %vm1179 = vweird.f32 %v1172
    %vm1180 = vmor %vm1178, %vm1179
    %v1181 = vsel %vm1180, %v1172, %v1177
    %v1182 = vrsqrt.pop %v830
    %v1183 = vmul.f32 %v1182, %v830
    %v1184 = vmul.f32 %v1183, %v1182
    %v1185 = vmul.f32 0.5, %v1184
    %v1186 = vsub.f32 1.5, %v1185
    %v1187 = vmul.f32 %v1182, %v1186
    %vm1188 = vweird.f32 %v830
    %vm1189 = vweird.f32 %v1182
    %vm1190 = vmor %vm1188, %vm1189
    %v1191 = vsel %vm1190, %v1182, %v1187
    %v1192 = vrsqrt.pop %v831
    %v1193 = vmul.f32 %v1192, %v831
    %v1194 = vmul.f32 %v1193, %v1192
    %v1195 = vmul.f32 0.5, %v1194
    %v1196 = vsub.f32 1.5, %v1195
    %v1197 = vmul.f32 %v1192, %v1196
    %vm1198 = vweird.f32 %v831
    %vm1199 = vweird.f32 %v1192
    %vm1200 = vmor %vm1198, %vm1199
    %v1201 = vsel %vm1200, %v1192, %v1197
    %v1202 = vrsqrt.pop %v832
    %v1203 = vmul.f32 %v1202, %v832
    %v1204 = vmul.f32 %v1203, %v1202
    %v1205 = vmul.f32 0.5, %v1204
    %v1206 = vsub.f32 1.5, %v1205
    %v1207 = vmul.f32 %v1202, %v1206
    %vm1208 = vweird.f32 %v832
    %vm1209 = vweird.f32 %v1202
    %vm1210 = vmor %vm1208, %vm1209
    %v1211 = vsel %vm1210, %v1202, %v1207
    %v1212 = vrsqrt.pop %v833
    %v1213 = vmul.f32 %v1212, %v833
    %v1214 = vmul.f32 %v1213, %v1212
    %v1215 = vmul.f32 0.5, %v1214
    %v1216 = vsub.f32 1.5, %v1215
    %v1217 = vmul.f32 %v1212, %v1216
    %vm1218 = vweird.f32 %v833
    %vm1219 = vweird.f32 %v1212
    %vm1220 = vmor %vm1218, %vm1219
    %v1221 = vsel %vm1220, %v1212, %v1217
    %v1222 = vrsqrt.pop %v834
    %v1223 = vmul.f32 %v1222, %v834
    %v1224 = vmul.f32 %v1223, %v1222
    %v1225 = vmul.f32 0.5, %v1224
    %v1226 = vsub.f32 1.5, %v1225
    %v1227 = vmul.f32 %v1222, %v1226
    %vm1228 = vweird.f32 %v834
    %vm1229 = vweird.f32 %v1222
    %vm1230 = vmor %vm1228, %vm1229
    %v1231 = vsel %vm1230, %v1222, %v1227
    %v1232 = vrsqrt.pop %v835
    %v1233 = vmul.f32 %v1232, %v835
    %v1234 = vmul.f32 %v1233, %v1232
    %v1235 = vmul.f32 0.5, %v1234
    %v1236 = vsub.f32 1.5, %v1235
    %v1237 = vmul.f32 %v1232, %v1236
    %vm1238 = vweird.f32 %v835
    %vm1239 = vweird.f32 %v1232
    %vm1240 = vmor %vm1238, %vm1239
    %v1241 = vsel %vm1240, %v1232, %v1237
    %v1242 = vrsqrt.pop %v836
    %v1243 = vmul.f32 %v1242, %v836
    %v1244 = vmul.f32 %v1243, %v1242
    %v1245 = vmul.f32 0.5, %v1244
    %v1246 = vsub.f32 1.5, %v1245
    %v1247 = vmul.f32 %v1242, %v1246
    %vm1248 = vweird.f32 %v836
    %vm1249 = vweird.f32 %v1242
    %vm1250 = vmor %vm1248, %vm1249
    %v1251 = vsel %vm1250, %v1242, %v1247
    %v1252 = vrsqrt.pop %v837
    %v1253 = vmul.f32 %v1252, %v837
    %v1254 = vmul.f32 %v1253, %v1252
    %v1255 = vmul.f32 0.5, %v1254
    %v1256 = vsub.f32 1.5, %v1255
    %v1257 = vmul.f32 %v1252, %v1256
    %vm1258 = vweird.f32 %v837
    %vm1259 = vweird.f32 %v1252
    %vm1260 = vmor %vm1258, %vm1259
    %v1261 = vsel %vm1260, %v1252, %v1257
    %v1262 = vrsqrt.pop %v838
    %v1263 = vmul.f32 %v1262, %v838
    %v1264 = vmul.f32 %v1263, %v1262
    %v1265 = vmul.f32 0.5, %v1264
    %v1266 = vsub.f32 1.5, %v1265
    %v1267 = vmul.f32 %v1262, %v1266
    %vm1268 = vweird.f32 %v838
    %vm1269 = vweird.f32 %v1262
    %vm1270 = vmor %vm1268, %vm1269
    %v1271 = vsel %vm1270, %v1262, %v1267
    %v1272 = vrsqrt.pop %v839
    %v1273 = vmul.f32 %v1272, %v839
    %v1274 = vmul.f32 %v1273, %v1272
    %v1275 = vmul.f32 0.5, %v1274
    %v1276 = vsub.f32 1.5, %v1275
    %v1277 = vmul.f32 %v1272, %v1276
    %vm1278 = vweird.f32 %v839
    %vm1279 = vweird.f32 %v1272
    %vm1280 = vmor %vm1278, %vm1279
    %v1281 = vsel %vm1280, %v1272, %v1277
    %v1282 = vrsqrt.pop %v840
    %v1283 = vmul.f32 %v1282, %v840
    %v1284 = vmul.f32 %v1283, %v1282
    %v1285 = vmul.f32 0.5, %v1284
    %v1286 = vsub.f32 1.5, %v1285
    %v1287 = vmul.f32 %v1282, %v1286
    %vm1288 = vweird.f32 %v840
    %vm1289 = vweird.f32 %v1282
    %vm1290 = vmor %vm1288, %vm1289
    %v1291 = vsel %vm1290, %v1282, %v1287
    %v1292 = vrsqrt.pop %v841
    %v1293 = vmul.f32 %v1292, %v841
    %v1294 = vmul.f32 %v1293, %v1292
    %v1295 = vmul.f32 0.5, %v1294
    %v1296 = vsub.f32 1.5, %v1295
    %v1297 = vmul.f32 %v1292, %v1296
    %vm1298 = vweird.f32 %v841
    %vm1299 = vweird.f32 %v1292
    %vm1300 = vmor %vm1298, %vm1299
    %v1301 = vsel %vm1300, %v1292, %v1297
    %v1302 = vrsqrt.pop %v842
    %v1303 = vmul.f32 %v1302, %v842
    %v1304 = vmul.f32 %v1303, %v1302
    %v1305 = vmul.f32 0.5, %v1304
    %v1306 = vsub.f32 1.5, %v1305
    %v1307 = vmul.f32 %v1302, %v1306
    %vm1308 = vweird.f32 %v842
    %vm1309 = vweird.f32 %v1302
    %vm1310 = vmor %vm1308, %vm1309
    %v1311 = vsel %vm1310, %v1302, %v1307
    %v1312 = vrsqrt.pop %v843
    %v1313 = vmul.f32 %v1312, %v843
    %v1314 = vmul.f32 %v1313, %v1312
    %v1315 = vmul.f32 0.5, %v1314
    %v1316 = vsub.f32 1.5, %v1315
    %v1317 = vmul.f32 %v1312, %v1316
    %vm1318 = vweird.f32 %v843
    %vm1319 = vweird.f32 %v1312
    %vm1320 = vmor %vm1318, %vm1319
    %v1321 = vsel %vm1320, %v1312, %v1317
    %v1322 = vrsqrt.pop %v844
    %v1323 = vmul.f32 %v1322, %v844
    %v1324 = vmul.f32 %v1323, %v1322
    %v1325 = vmul.f32 0.5, %v1324
    %v1326 = vsub.f32 1.5, %v1325
    %v1327 = vmul.f32 %v1322, %v1326
    %vm1328 = vweird.f32 %v844
    %vm1329 = vweird.f32 %v1322
    %vm1330 = vmor %vm1328, %vm1329
    %v1331 = vsel %vm1330, %v1322, %v1327
    %v1332 = vrsqrt.pop %v845
    %v1333 = vmul.f32 %v1332, %v845
    %v1334 = vmul.f32 %v1333, %v1332
    %v1335 = vmul.f32 0.5, %v1334
    %v1336 = vsub.f32 1.5, %v1335
    %v1337 = vmul.f32 %v1332, %v1336
    %vm1338 = vweird.f32 %v845
    %vm1339 = vweird.f32 %v1332
    %vm1340 = vmor %vm1338, %vm1339
    %v1341 = vsel %vm1340, %v1332, %v1337
    %v1342 = vrsqrt.pop %v846
    %v1343 = vmul.f32 %v1342, %v846
    %v1344 = vmul.f32 %v1343, %v1342
    %v1345 = vmul.f32 0.5, %v1344
    %v1346 = vsub.f32 1.5, %v1345
    %v1347 = vmul.f32 %v1342, %v1346
    %vm1348 = vweird.f32 %v846
    %vm1349 = vweird.f32 %v1342
    %vm1350 = vmor %vm1348, %vm1349
    %v1351 = vsel %vm1350, %v1342, %v1347
    %v1352 = vrsqrt.pop %v847
    %v1353 = vmul.f32 %v1352, %v847
    %v1354 = vmul.f32 %v1353, %v1352
    %v1355 = vmul.f32 0.5, %v1354
    %v1356 = vsub.f32 1.5, %v1355
    %v1357 = vmul.f32 %v1352, %v1356
    %vm1358 = vweird.f32 %v847
    %vm1359 = vweird.f32 %v1352
    %vm1360 = vmor %vm1358, %vm1359
    %v1361 = vsel %vm1360, %v1352, %v1357
    %v1362 = vrsqrt.pop %v848
    %v1363 = vmul.f32 %v1362, %v848
    %v1364 = vmul.f32 %v1363, %v1362
    %v1365 = vmul.f32 0.5, %v1364
    %v1366 = vsub.f32 1.5, %v1365
    %v1367 = vmul.f32 %v1362, %v1366
    %vm1368 = vweird.f32 %v848
    %vm1369 = vweird.f32 %v1362
    %vm1370 = vmor %vm1368, %vm1369
    %v1371 = vsel %vm1370, %v1362, %v1367
    %v1372 = vrsqrt.pop %v849
    %v1373 = vmul.f32 %v1372, %v849
    %v1374 = vmul.f32 %v1373, %v1372
    %v1375 = vmul.f32 0.5, %v1374
    %v1376 = vsub.f32 1.5, %v1375
    %v1377 = vmul.f32 %v1372, %v1376
    %vm1378 = vweird.f32 %v849
    %vm1379 = vweird.f32 %v1372
    %vm1380 = vmor %vm1378, %vm1379
    %v1381 = vsel %vm1380, %v1372, %v1377
    %v1382 = vrsqrt.pop %v850
    %v1383 = vmul.f32 %v1382, %v850
    %v1384 = vmul.f32 %v1383, %v1382
    %v1385 = vmul.f32 0.5, %v1384
    %v1386 = vsub.f32 1.5, %v1385
    %v1387 = vmul.f32 %v1382, %v1386
    %vm1388 = vweird.f32 %v850
    %vm1389 = vweird.f32 %v1382
    %vm1390 = vmor %vm1388, %vm1389
    %v1391 = vsel %vm1390, %v1382, %v1387
    %v1392 = vrsqrt.pop %v851
    %v1393 = vmul.f32 %v1392, %v851
    %v1394 = vmul.f32 %v1393, %v1392
    %v1395 = vmul.f32 0.5, %v1394
    %v1396 = vsub.f32 1.5, %v1395
    %v1397 = vmul.f32 %v1392, %v1396
    %vm1398 = vweird.f32 %v851
    %vm1399 = vweird.f32 %v1392
    %vm1400 = vmor %vm1398, %vm1399
    %v1401 = vsel %vm1400, %v1392, %v1397
    %v1402 = vrsqrt.pop %v852
    %v1403 = vmul.f32 %v1402, %v852
    %v1404 = vmul.f32 %v1403, %v1402
    %v1405 = vmul.f32 0.5, %v1404
    %v1406 = vsub.f32 1.5, %v1405
    %v1407 = vmul.f32 %v1402, %v1406
    %vm1408 = vweird.f32 %v852
    %vm1409 = vweird.f32 %v1402
    %vm1410 = vmor %vm1408, %vm1409
    %v1411 = vsel %vm1410, %v1402, %v1407
    %v1412 = vrsqrt.pop %v853
    %v1413 = vmul.f32 %v1412, %v853
    %v1414 = vmul.f32 %v1413, %v1412
    %v1415 = vmul.f32 0.5, %v1414
    %v1416 = vsub.f32 1.5, %v1415
    %v1417 = vmul.f32 %v1412, %v1416
    %vm1418 = vweird.f32 %v853
    %vm1419 = vweird.f32 %v1412
    %vm1420 = vmor %vm1418, %vm1419
    %v1421 = vsel %vm1420, %v1412, %v1417
    %v1422 = vrsqrt.pop %v854
    %v1423 = vmul.f32 %v1422, %v854
    %v1424 = vmul.f32 %v1423, %v1422
    %v1425 = vmul.f32 0.5, %v1424
    %v1426 = vsub.f32 1.5, %v1425
    %v1427 = vmul.f32 %v1422, %v1426
    %vm1428 = vweird.f32 %v854
    %vm1429 = vweird.f32 %v1422
    %vm1430 = vmor %vm1428, %vm1429
    %v1431 = vsel %vm1430, %v1422, %v1427
    %v1432 = vrsqrt.pop %v855
    %v1433 = vmul.f32 %v1432, %v855
    %v1434 = vmul.f32 %v1433, %v1432
    %v1435 = vmul.f32 0.5, %v1434
    %v1436 = vsub.f32 1.5, %v1435
    %v1437 = vmul.f32 %v1432, %v1436
    %vm1438 = vweird.f32 %v855
    %vm1439 = vweird.f32 %v1432
    %vm1440 = vmor %vm1438, %vm1439
    %v1441 = vsel %vm1440, %v1432, %v1437
    %v1442 = vrsqrt.pop %v856
    %v1443 = vmul.f32 %v1442, %v856
    %v1444 = vmul.f32 %v1443, %v1442
    %v1445 = vmul.f32 0.5, %v1444
    %v1446 = vsub.f32 1.5, %v1445
    %v1447 = vmul.f32 %v1442, %v1446
    %vm1448 = vweird.f32 %v856
    %vm1449 = vweird.f32 %v1442
    %vm1450 = vmor %vm1448, %vm1449
    %v1451 = vsel %vm1450, %v1442, %v1447
    %v1452 = vrsqrt.pop %v857
    %v1453 = vmul.f32 %v1452, %v857
    %v1454 = vmul.f32 %v1453, %v1452
    %v1455 = vmul.f32 0.5, %v1454
    %v1456 = vsub.f32 1.5, %v1455
    %v1457 = vmul.f32 %v1452, %v1456
    %vm1458 = vweird.f32 %v857
    %vm1459 = vweird.f32 %v1452
    %vm1460 = vmor %vm1458, %vm1459
    %v1461 = vsel %vm1460, %v1452, %v1457
    %v1462 = vrsqrt.pop %v858
    %v1463 = vmul.f32 %v1462, %v858
    %v1464 = vmul.f32 %v1463, %v1462
    %v1465 = vmul.f32 0.5, %v1464
    %v1466 = vsub.f32 1.5, %v1465
    %v1467 = vmul.f32 %v1462, %v1466
    %vm1468 = vweird.f32 %v858
    %vm1469 = vweird.f32 %v1462
    %vm1470 = vmor %vm1468, %vm1469
    %v1471 = vsel %vm1470, %v1462, %v1467
    %v1472 = vrsqrt.pop %v859
    %v1473 = vmul.f32 %v1472, %v859
    %v1474 = vmul.f32 %v1473, %v1472
    %v1475 = vmul.f32 0.5, %v1474
    %v1476 = vsub.f32 1.5, %v1475
    %v1477 = vmul.f32 %v1472, %v1476
    %vm1478 = vweird.f32 %v859
    %vm1479 = vweird.f32 %v1472
    %vm1480 = vmor %vm1478, %vm1479
    %v1481 = vsel %vm1480, %v1472, %v1477
    %v1482 = vrsqrt.pop %v860
    %v1483 = vmul.f32 %v1482, %v860
    %v1484 = vmul.f32 %v1483, %v1482
    %v1485 = vmul.f32 0.5, %v1484
    %v1486 = vsub.f32 1.5, %v1485
    %v1487 = vmul.f32 %v1482, %v1486
    %vm1488 = vweird.f32 %v860
    %vm1489 = vweird.f32 %v1482
    %vm1490 = vmor %vm1488, %vm1489
    %v1491 = vsel %vm1490, %v1482, %v1487
    %v1492 = vrsqrt.pop %v861
    %v1493 = vmul.f32 %v1492, %v861
    %v1494 = vmul.f32 %v1493, %v1492
    %v1495 = vmul.f32 0.5, %v1494
    %v1496 = vsub.f32 1.5, %v1495
    %v1497 = vmul.f32 %v1492, %v1496
    %vm1498 = vweird.f32 %v861
    %vm1499 = vweird.f32 %v1492
    %vm1500 = vmor %vm1498, %vm1499
    %v1501 = vsel %vm1500, %v1492, %v1497
    %v1502 = vmul.f32 %v414, %v871
    %v1503 = vmul.f32 %v415, %v881
    %v1504 = vmul.f32 %v416, %v891
    %v1505 = vmul.f32 %v417, %v901
    %v1506 = vmul.f32 %v418, %v911
    %v1507 = vmul.f32 %v419, %v921
    %v1508 = vmul.f32 %v420, %v931
    %v1509 = vmul.f32 %v421, %v941
    %v1510 = vmul.f32 %v422, %v951
    %v1511 = vmul.f32 %v423, %v961
    %v1512 = vmul.f32 %v424, %v971
    %v1513 = vmul.f32 %v425, %v981
    %v1514 = vmul.f32 %v426, %v991
    %v1515 = vmul.f32 %v427, %v1001
    %v1516 = vmul.f32 %v428, %v1011
    %v1517 = vmul.f32 %v429, %v1021
    %v1518 = vmul.f32 %v430, %v1031
    %v1519 = vmul.f32 %v431, %v1041
    %v1520 = vmul.f32 %v432, %v1051
    %v1521 = vmul.f32 %v433, %v1061
    %v1522 = vmul.f32 %v434, %v1071
    %v1523 = vmul.f32 %v435, %v1081
    %v1524 = vmul.f32 %v436, %v1091
    %v1525 = vmul.f32 %v437, %v1101
    %v1526 = vmul.f32 %v438, %v1111
    %v1527 = vmul.f32 %v439, %v1121
    %v1528 = vmul.f32 %v440, %v1131
    %v1529 = vmul.f32 %v441, %v1141
    %v1530 = vmul.f32 %v442, %v1151
    %v1531 = vmul.f32 %v443, %v1161
    %v1532 = vmul.f32 %v444, %v1171
    %v1533 = vmul.f32 %v445, %v1181
    %v1534 = vmul.f32 %v446, %v1191
    %v1535 = vmul.f32 %v447, %v1201
    %v1536 = vmul.f32 %v448, %v1211
    %v1537 = vmul.f32 %v449, %v1221
    %v1538 = vmul.f32 %v450, %v1231
    %v1539 = vmul.f32 %v451, %v1241
    %v1540 = vmul.f32 %v452, %v1251
    %v1541 = vmul.f32 %v453, %v1261
    %v1542 = vmul.f32 %v454, %v1271
    %v1543 = vmul.f32 %v455, %v1281
    %v1544 = vmul.f32 %v456, %v1291
    %v1545 = vmul.f32 %v457, %v1301
    %v1546 = vmul.f32 %v458, %v1311
    %v1547 = vmul.f32 %v459, %v1321
    %v1548 = vmul.f32 %v460, %v1331
    %v1549 = vmul.f32 %v461, %v1341
    %v1550 = vmul.f32 %v462, %v1351
    %v1551 = vmul.f32 %v463, %v1361
    %v1552 = vmul.f32 %v464, %v1371
    %v1553 = vmul.f32 %v465, %v1381
    %v1554 = vmul.f32 %v466, %v1391
    %v1555 = vmul.f32 %v467, %v1401
    %v1556 = vmul.f32 %v468, %v1411
    %v1557 = vmul.f32 %v469, %v1421
    %v1558 = vmul.f32 %v470, %v1431
    %v1559 = vmul.f32 %v471, %v1441
    %v1560 = vmul.f32 %v472, %v1451
    %v1561 = vmul.f32 %v473, %v1461
    %v1562 = vmul.f32 %v474, %v1471
    %v1563 = vmul.f32 %v475, %v1481
    %v1564 = vmul.f32 %v476, %v1491
    %v1565 = vmul.f32 %v477, %v1501
    %v1566 = vld [vmem:[%s3] sm:$0x1]
    %v1568 = vperm.slane %v1566, 0
    %v1570 = vmul.f32 %v1502, %v1568
    %v1571 = vmul.f32 %v1503, %v1568
    %v1572 = vmul.f32 %v1504, %v1568
    %v1573 = vmul.f32 %v1505, %v1568
    %v1574 = vmul.f32 %v1506, %v1568
    %v1575 = vmul.f32 %v1507, %v1568
    %v1576 = vmul.f32 %v1508, %v1568
    %v1577 = vmul.f32 %v1509, %v1568
    %v1578 = vmul.f32 %v1510, %v1568
    %v1579 = vmul.f32 %v1511, %v1568
    %v1580 = vmul.f32 %v1512, %v1568
    %v1581 = vmul.f32 %v1513, %v1568
    %v1582 = vmul.f32 %v1514, %v1568
    %v1583 = vmul.f32 %v1515, %v1568
    %v1584 = vmul.f32 %v1516, %v1568
    %v1585 = vmul.f32 %v1517, %v1568
    %v1586 = vmul.f32 %v1518, %v1568
    %v1587 = vmul.f32 %v1519, %v1568
    %v1588 = vmul.f32 %v1520, %v1568
    %v1589 = vmul.f32 %v1521, %v1568
    %v1590 = vmul.f32 %v1522, %v1568
    %v1591 = vmul.f32 %v1523, %v1568
    %v1592 = vmul.f32 %v1524, %v1568
    %v1593 = vmul.f32 %v1525, %v1568
    %v1594 = vmul.f32 %v1526, %v1568
    %v1595 = vmul.f32 %v1527, %v1568
    %v1596 = vmul.f32 %v1528, %v1568
    %v1597 = vmul.f32 %v1529, %v1568
    %v1598 = vmul.f32 %v1530, %v1568
    %v1599 = vmul.f32 %v1531, %v1568
    %v1600 = vmul.f32 %v1532, %v1568
    %v1601 = vmul.f32 %v1533, %v1568
    %v1602 = vmul.f32 %v1534, %v1568
    %v1603 = vmul.f32 %v1535, %v1568
    %v1604 = vmul.f32 %v1536, %v1568
    %v1605 = vmul.f32 %v1537, %v1568
    %v1606 = vmul.f32 %v1538, %v1568
    %v1607 = vmul.f32 %v1539, %v1568
    %v1608 = vmul.f32 %v1540, %v1568
    %v1609 = vmul.f32 %v1541, %v1568
    %v1610 = vmul.f32 %v1542, %v1568
    %v1611 = vmul.f32 %v1543, %v1568
    %v1612 = vmul.f32 %v1544, %v1568
    %v1613 = vmul.f32 %v1545, %v1568
    %v1614 = vmul.f32 %v1546, %v1568
    %v1615 = vmul.f32 %v1547, %v1568
    %v1616 = vmul.f32 %v1548, %v1568
    %v1617 = vmul.f32 %v1549, %v1568
    %v1618 = vmul.f32 %v1550, %v1568
    %v1619 = vmul.f32 %v1551, %v1568
    %v1620 = vmul.f32 %v1552, %v1568
    %v1621 = vmul.f32 %v1553, %v1568
    %v1622 = vmul.f32 %v1554, %v1568
    %v1623 = vmul.f32 %v1555, %v1568
    %v1624 = vmul.f32 %v1556, %v1568
    %v1625 = vmul.f32 %v1557, %v1568
    %v1626 = vmul.f32 %v1558, %v1568
    %v1627 = vmul.f32 %v1559, %v1568
    %v1628 = vmul.f32 %v1560, %v1568
    %v1629 = vmul.f32 %v1561, %v1568
    %v1630 = vmul.f32 %v1562, %v1568
    %v1631 = vmul.f32 %v1563, %v1568
    %v1632 = vmul.f32 %v1564, %v1568
    %v1633 = vmul.f32 %v1565, %v1568
    %v1634 = vld [vmem:[%s4] sm:$0x1]
    %v1636 = vperm.slane %v1634, 0
    %v1638 = vadd.f32 %v1570, %v1636
    %v1639 = vadd.f32 %v1571, %v1636
    %v1640 = vadd.f32 %v1572, %v1636
    %v1641 = vadd.f32 %v1573, %v1636
    %v1642 = vadd.f32 %v1574, %v1636
    %v1643 = vadd.f32 %v1575, %v1636
    %v1644 = vadd.f32 %v1576, %v1636
    %v1645 = vadd.f32 %v1577, %v1636
    %v1646 = vadd.f32 %v1578, %v1636
    %v1647 = vadd.f32 %v1579, %v1636
    %v1648 = vadd.f32 %v1580, %v1636
    %v1649 = vadd.f32 %v1581, %v1636
    %v1650 = vadd.f32 %v1582, %v1636
    %v1651 = vadd.f32 %v1583, %v1636
    %v1652 = vadd.f32 %v1584, %v1636
    %v1653 = vadd.f32 %v1585, %v1636
    %v1654 = vadd.f32 %v1586, %v1636
    %v1655 = vadd.f32 %v1587, %v1636
    %v1656 = vadd.f32 %v1588, %v1636
    %v1657 = vadd.f32 %v1589, %v1636
    %v1658 = vadd.f32 %v1590, %v1636
    %v1659 = vadd.f32 %v1591, %v1636
    %v1660 = vadd.f32 %v1592, %v1636
    %v1661 = vadd.f32 %v1593, %v1636
    %v1662 = vadd.f32 %v1594, %v1636
    %v1663 = vadd.f32 %v1595, %v1636
    %v1664 = vadd.f32 %v1596, %v1636
    %v1665 = vadd.f32 %v1597, %v1636
    %v1666 = vadd.f32 %v1598, %v1636
    %v1667 = vadd.f32 %v1599, %v1636
    %v1668 = vadd.f32 %v1600, %v1636
    %v1669 = vadd.f32 %v1601, %v1636
    %v1670 = vadd.f32 %v1602, %v1636
    %v1671 = vadd.f32 %v1603, %v1636
    %v1672 = vadd.f32 %v1604, %v1636
    %v1673 = vadd.f32 %v1605, %v1636
    %v1674 = vadd.f32 %v1606, %v1636
    %v1675 = vadd.f32 %v1607, %v1636
    %v1676 = vadd.f32 %v1608, %v1636
    %v1677 = vadd.f32 %v1609, %v1636
    %v1678 = vadd.f32 %v1610, %v1636
    %v1679 = vadd.f32 %v1611, %v1636
    %v1680 = vadd.f32 %v1612, %v1636
    %v1681 = vadd.f32 %v1613, %v1636
    %v1682 = vadd.f32 %v1614, %v1636
    %v1683 = vadd.f32 %v1615, %v1636
    %v1684 = vadd.f32 %v1616, %v1636
    %v1685 = vadd.f32 %v1617, %v1636
    %v1686 = vadd.f32 %v1618, %v1636
    %v1687 = vadd.f32 %v1619, %v1636
    %v1688 = vadd.f32 %v1620, %v1636
    %v1689 = vadd.f32 %v1621, %v1636
    %v1690 = vadd.f32 %v1622, %v1636
    %v1691 = vadd.f32 %v1623, %v1636
    %v1692 = vadd.f32 %v1624, %v1636
    %v1693 = vadd.f32 %v1625, %v1636
    %v1694 = vadd.f32 %v1626, %v1636
    %v1695 = vadd.f32 %v1627, %v1636
    %v1696 = vadd.f32 %v1628, %v1636
    %v1697 = vadd.f32 %v1629, %v1636
    %v1698 = vadd.f32 %v1630, %v1636
    %v1699 = vadd.f32 %v1631, %v1636
    %v1700 = vadd.f32 %v1632, %v1636
    %v1701 = vadd.f32 %v1633, %v1636
    %v1702 = vpack.c.bf16 %v1639, %v1638
    %v1703 = vpack.c.bf16 %v1641, %v1640
    %v1704 = vpack.c.bf16 %v1643, %v1642
    %v1705 = vpack.c.bf16 %v1645, %v1644
    %v1706 = vpack.c.bf16 %v1647, %v1646
    %v1707 = vpack.c.bf16 %v1649, %v1648
    %v1708 = vpack.c.bf16 %v1651, %v1650
    %v1709 = vpack.c.bf16 %v1653, %v1652
    %v1710 = vpack.c.bf16 %v1655, %v1654
    %v1711 = vpack.c.bf16 %v1657, %v1656
    %v1712 = vpack.c.bf16 %v1659, %v1658
    %v1713 = vpack.c.bf16 %v1661, %v1660
    %v1714 = vpack.c.bf16 %v1663, %v1662
    %v1715 = vpack.c.bf16 %v1665, %v1664
    %v1716 = vpack.c.bf16 %v1667, %v1666
    %v1717 = vpack.c.bf16 %v1669, %v1668
    %v1718 = vpack.c.bf16 %v1671, %v1670
    %v1719 = vpack.c.bf16 %v1673, %v1672
    %v1720 = vpack.c.bf16 %v1675, %v1674
    %v1721 = vpack.c.bf16 %v1677, %v1676
    %v1722 = vpack.c.bf16 %v1679, %v1678
    %v1723 = vpack.c.bf16 %v1681, %v1680
    %v1724 = vpack.c.bf16 %v1683, %v1682
    %v1725 = vpack.c.bf16 %v1685, %v1684
    %v1726 = vpack.c.bf16 %v1687, %v1686
    %v1727 = vpack.c.bf16 %v1689, %v1688
    %v1728 = vpack.c.bf16 %v1691, %v1690
    %v1729 = vpack.c.bf16 %v1693, %v1692
    %v1730 = vpack.c.bf16 %v1695, %v1694
    %v1731 = vpack.c.bf16 %v1697, %v1696
    %v1732 = vpack.c.bf16 %v1699, %v1698
    %v1733 = vpack.c.bf16 %v1701, %v1700
    %v1734 = vld [vmem:[%s1] sm:$0xff]
    %v1735 = vld [vmem:[%s1 + $0x8] sm:$0xf]
    %v1736 = vld [vmem:[%s1 + $0xc] sm:$0xff]
    %v1737 = vld [vmem:[%s1 + $0x14] sm:$0xf]
    %v1738 = vld [vmem:[%s1 + $0x18] sm:$0xff]
    %v1739 = vld [vmem:[%s1 + $0x20] sm:$0xf]
    %v1740 = vld [vmem:[%s1 + $0x24] sm:$0xff]
    %v1741 = vld [vmem:[%s1 + $0x2c] sm:$0xf]
    %v1742 = vld [vmem:[%s1 + $0x30] sm:$0xff]
    %v1743 = vld [vmem:[%s1 + $0x38] sm:$0xf]
    %v1744 = vld [vmem:[%s1 + $0x3c] sm:$0xff]
    %v1745 = vld [vmem:[%s1 + $0x44] sm:$0xf]
    %v1746 = vld [vmem:[%s1 + $0x48] sm:$0x11]
    %v1747 = vld [vmem:[%s1 + $0x50] sm:$0x1]
    %v1748 = vld [vmem:[%s2] sm:$0x7]
    %v1750 = vperm.slane %v1748, 0
    %v1751 = vperm.slane %v1748, 1
    %v1752 = vperm.slane %v1748, 2
    %v1770 = vunpack.c.l.b16 %v1734
    %v1771 = vunpack.c.h.b16 %v1734
    %v1772 = vunpack.c.l.b16 %v1735
    %v1773 = vunpack.c.l.b16 %v1736
    %v1774 = vunpack.c.h.b16 %v1736
    %v1775 = vunpack.c.l.b16 %v1737
    %v1776 = vunpack.c.l.b16 %v1738
    %v1777 = vunpack.c.h.b16 %v1738
    %v1778 = vunpack.c.l.b16 %v1739
    %v1779 = vunpack.c.l.b16 %v1740
    %v1780 = vunpack.c.h.b16 %v1740
    %v1781 = vunpack.c.l.b16 %v1741
    %v1782 = vunpack.c.l.b16 %v1742
    %v1783 = vunpack.c.h.b16 %v1742
    %v1784 = vunpack.c.l.b16 %v1743
    %v1785 = vunpack.c.l.b16 %v1744
    %v1786 = vunpack.c.h.b16 %v1744
    %v1787 = vunpack.c.l.b16 %v1745
    %v1788 = vunpack.c.l.b16 %v1746
    %v1789 = vunpack.c.h.b16 %v1746
    %v1790 = vunpack.c.l.b16 %v1747
    %v1791 = vpack.c.b16 %v1773, %v1770
    %v1792 = vpack.c.b16 %v1774, %v1771
    %v1793 = vpack.c.b16 %v1775, %v1772
    %v1794 = vpack.c.b16 %v1779, %v1776
    %v1795 = vpack.c.b16 %v1780, %v1777
    %v1796 = vpack.c.b16 %v1781, %v1778
    %v1797 = vpack.c.b16 %v1785, %v1782
    %v1798 = vpack.c.b16 %v1786, %v1783
    %v1799 = vpack.c.b16 %v1787, %v1784
    %v1800 = vpack.c.b16 %v1788, %v1788
    %v1801 = vpack.c.b16 %v1789, %v1789
    %v1802 = vpack.c.b16 %v1790, %v1790
    %v1813 = vsel %vm150, %v1702, 0
    %v1816 = vsel %vm150, %v1703, 0
    %v1819 = vsel %vm150, %v1704, 0
    %v1822 = vsel %vm150, %v1705, 0
    %v1825 = vsel %vm150, %v1706, 0
    %v1828 = vsel %vm150, %v1707, 0
    %v1831 = vsel %vm150, %v1708, 0
    %v1834 = vsel %vm150, %v1709, 0
    %v1837 = vsel %vm150, %v1710, 0
    %v1840 = vsel %vm150, %v1711, 0
    %v1843 = vsel %vm150, %v1712, 0
    %v1846 = vsel %vm150, %v1713, 0
    %v1849 = vsel %vm150, %v1714, 0
    %v1852 = vsel %vm150, %v1715, 0
    %v1855 = vsel %vm150, %v1716, 0
    %v1858 = vsel %vm150, %v1717, 0
    %v1861 = vsel %vm150, %v1718, 0
    %v1864 = vsel %vm150, %v1719, 0
    %v1867 = vsel %vm150, %v1720, 0
    %v1870 = vsel %vm150, %v1721, 0
    %v1873 = vsel %vm150, %v1722, 0
    %v1876 = vsel %vm150, %v1723, 0
    %v1879 = vsel %vm150, %v1724, 0
    %v1882 = vsel %vm150, %v1725, 0
    %v1885 = vsel %vm150, %v1726, 0
    %v1888 = vsel %vm150, %v1727, 0
    %v1891 = vsel %vm150, %v1728, 0
    %v1894 = vsel %vm150, %v1729, 0
    %v1897 = vsel %vm150, %v1730, 0
    %v1900 = vsel %vm150, %v1731, 0
    %v1903 = vsel %vm150, %v1732, 0
    %v1906 = vsel %vm150, %v1733, 0
    %vm1908 = vcmask 1040384
    %v1909 = vsel 0, 4294967295, 65535
    %v1910 = vsel %vm1908, %v1909, 0
    %v1912 = vand.u32 %v1800, %v1910
    %v1915 = vand.u32 %v1801, %v1910
    %v1918 = vand.u32 %v1802, %v1910
    %1920 = vmatpush.bf16.msra.mxu0 0
    %1921 = vmatpush.bf16.msra.mxu0 0
    %1922 = vmatpush.bf16.msra.mxu0 0
    %1923 = vmatpush.bf16.msra.mxu0 0
    %1924 = vmatpush.bf16.msra.mxu0 %v1912
    %1925 = vmatpush.bf16.msra.mxu0 %v1797
    %1926 = vmatpush.bf16.msra.mxu0 %v1794
    %1927 = vmatpush.bf16.msra.mxu0 %v1791
    %1928 = vmatmul.bf16.gmra.mxu0 %v1813
    %v1929 = vpop.f32.mrf.mxu0
    %v1930 = vadd.f32 %v1750, %v1929
    %v1931 = vpop.f32.mrf.mxu0
    %v1932 = vadd.f32 %v1750, %v1931
    %1933 = vmatmul.bf16.gmra.mxu0 %v1816
    %v1934 = vpop.f32.mrf.mxu0
    %v1935 = vadd.f32 %v1750, %v1934
    %v1936 = vpop.f32.mrf.mxu0
    %v1937 = vadd.f32 %v1750, %v1936
    %1938 = vmatmul.bf16.gmra.mxu0 %v1819
    %v1939 = vpop.f32.mrf.mxu0
    %v1940 = vadd.f32 %v1750, %v1939
    %v1941 = vpop.f32.mrf.mxu0
    %v1942 = vadd.f32 %v1750, %v1941
    %1943 = vmatmul.bf16.gmra.mxu0 %v1822
    %v1944 = vpop.f32.mrf.mxu0
    %v1945 = vadd.f32 %v1750, %v1944
    %v1946 = vpop.f32.mrf.mxu0
    %v1947 = vadd.f32 %v1750, %v1946
    %1948 = vmatmul.bf16.gmra.mxu0 %v1825
    %v1949 = vpop.f32.mrf.mxu0
    %v1950 = vadd.f32 %v1750, %v1949
    %v1951 = vpop.f32.mrf.mxu0
    %v1952 = vadd.f32 %v1750, %v1951
    %1953 = vmatmul.bf16.gmra.mxu0 %v1828
    %v1954 = vpop.f32.mrf.mxu0
    %v1955 = vadd.f32 %v1750, %v1954
    %v1956 = vpop.f32.mrf.mxu0
    %v1957 = vadd.f32 %v1750, %v1956
    %1958 = vmatmul.bf16.gmra.mxu0 %v1831
    %v1959 = vpop.f32.mrf.mxu0
    %v1960 = vadd.f32 %v1750, %v1959
    %v1961 = vpop.f32.mrf.mxu0
    %v1962 = vadd.f32 %v1750, %v1961
    %1963 = vmatmul.bf16.gmra.mxu0 %v1834
    %v1964 = vpop.f32.mrf.mxu0
    %v1965 = vadd.f32 %v1750, %v1964
    %v1966 = vpop.f32.mrf.mxu0
    %v1967 = vadd.f32 %v1750, %v1966
    %1968 = vmatmul.bf16.gmra.mxu0 %v1837
    %v1969 = vpop.f32.mrf.mxu0
    %v1970 = vadd.f32 %v1750, %v1969
    %v1971 = vpop.f32.mrf.mxu0
    %v1972 = vadd.f32 %v1750, %v1971
    %1973 = vmatmul.bf16.gmra.mxu0 %v1840
    %v1974 = vpop.f32.mrf.mxu0
    %v1975 = vadd.f32 %v1750, %v1974
    %v1976 = vpop.f32.mrf.mxu0
    %v1977 = vadd.f32 %v1750, %v1976
    %1978 = vmatmul.bf16.gmra.mxu0 %v1843
    %v1979 = vpop.f32.mrf.mxu0
    %v1980 = vadd.f32 %v1750, %v1979
    %v1981 = vpop.f32.mrf.mxu0
    %v1982 = vadd.f32 %v1750, %v1981
    %1983 = vmatmul.bf16.gmra.mxu0 %v1846
    %v1984 = vpop.f32.mrf.mxu0
    %v1985 = vadd.f32 %v1750, %v1984
    %v1986 = vpop.f32.mrf.mxu0
    %v1987 = vadd.f32 %v1750, %v1986
    %1988 = vmatmul.bf16.gmra.mxu0 %v1849
    %v1989 = vpop.f32.mrf.mxu0
    %v1990 = vadd.f32 %v1750, %v1989
    %v1991 = vpop.f32.mrf.mxu0
    %v1992 = vadd.f32 %v1750, %v1991
    %1993 = vmatmul.bf16.gmra.mxu0 %v1852
    %v1994 = vpop.f32.mrf.mxu0
    %v1995 = vadd.f32 %v1750, %v1994
    %v1996 = vpop.f32.mrf.mxu0
    %v1997 = vadd.f32 %v1750, %v1996
    %1998 = vmatmul.bf16.gmra.mxu0 %v1855
    %v1999 = vpop.f32.mrf.mxu0
    %v2000 = vadd.f32 %v1750, %v1999
    %v2001 = vpop.f32.mrf.mxu0
    %v2002 = vadd.f32 %v1750, %v2001
    %2003 = vmatmul.bf16.gmra.mxu0 %v1858
    %v2004 = vpop.f32.mrf.mxu0
    %v2005 = vadd.f32 %v1750, %v2004
    %v2006 = vpop.f32.mrf.mxu0
    %v2007 = vadd.f32 %v1750, %v2006
    %2008 = vmatmul.bf16.gmra.mxu0 %v1861
    %v2009 = vpop.f32.mrf.mxu0
    %v2010 = vadd.f32 %v1750, %v2009
    %v2011 = vpop.f32.mrf.mxu0
    %v2012 = vadd.f32 %v1750, %v2011
    %2013 = vmatmul.bf16.gmra.mxu0 %v1864
    %v2014 = vpop.f32.mrf.mxu0
    %v2015 = vadd.f32 %v1750, %v2014
    %v2016 = vpop.f32.mrf.mxu0
    %v2017 = vadd.f32 %v1750, %v2016
    %2018 = vmatmul.bf16.gmra.mxu0 %v1867
    %v2019 = vpop.f32.mrf.mxu0
    %v2020 = vadd.f32 %v1750, %v2019
    %v2021 = vpop.f32.mrf.mxu0
    %v2022 = vadd.f32 %v1750, %v2021
    %2023 = vmatmul.bf16.gmra.mxu0 %v1870
    %v2024 = vpop.f32.mrf.mxu0
    %v2025 = vadd.f32 %v1750, %v2024
    %v2026 = vpop.f32.mrf.mxu0
    %v2027 = vadd.f32 %v1750, %v2026
    %2028 = vmatmul.bf16.gmra.mxu0 %v1873
    %v2029 = vpop.f32.mrf.mxu0
    %v2030 = vadd.f32 %v1750, %v2029
    %v2031 = vpop.f32.mrf.mxu0
    %v2032 = vadd.f32 %v1750, %v2031
    %2033 = vmatmul.bf16.gmra.mxu0 %v1876
    %v2034 = vpop.f32.mrf.mxu0
    %v2035 = vadd.f32 %v1750, %v2034
    %v2036 = vpop.f32.mrf.mxu0
    %v2037 = vadd.f32 %v1750, %v2036
    %2038 = vmatmul.bf16.gmra.mxu0 %v1879
    %v2039 = vpop.f32.mrf.mxu0
    %v2040 = vadd.f32 %v1750, %v2039
    %v2041 = vpop.f32.mrf.mxu0
    %v2042 = vadd.f32 %v1750, %v2041
    %2043 = vmatmul.bf16.gmra.mxu0 %v1882
    %v2044 = vpop.f32.mrf.mxu0
    %v2045 = vadd.f32 %v1750, %v2044
    %v2046 = vpop.f32.mrf.mxu0
    %v2047 = vadd.f32 %v1750, %v2046
    %2048 = vmatmul.bf16.gmra.mxu0 %v1885
    %v2049 = vpop.f32.mrf.mxu0
    %v2050 = vadd.f32 %v1750, %v2049
    %v2051 = vpop.f32.mrf.mxu0
    %v2052 = vadd.f32 %v1750, %v2051
    %2053 = vmatmul.bf16.gmra.mxu0 %v1888
    %v2054 = vpop.f32.mrf.mxu0
    %v2055 = vadd.f32 %v1750, %v2054
    %v2056 = vpop.f32.mrf.mxu0
    %v2057 = vadd.f32 %v1750, %v2056
    %2058 = vmatmul.bf16.gmra.mxu0 %v1891
    %v2059 = vpop.f32.mrf.mxu0
    %v2060 = vadd.f32 %v1750, %v2059
    %v2061 = vpop.f32.mrf.mxu0
    %v2062 = vadd.f32 %v1750, %v2061
    %2063 = vmatmul.bf16.gmra.mxu0 %v1894
    %v2064 = vpop.f32.mrf.mxu0
    %v2065 = vadd.f32 %v1750, %v2064
    %v2066 = vpop.f32.mrf.mxu0
    %v2067 = vadd.f32 %v1750, %v2066
    %2068 = vmatmul.bf16.gmra.mxu0 %v1897
    %v2069 = vpop.f32.mrf.mxu0
    %v2070 = vadd.f32 %v1750, %v2069
    %v2071 = vpop.f32.mrf.mxu0
    %v2072 = vadd.f32 %v1750, %v2071
    %2073 = vmatmul.bf16.gmra.mxu0 %v1900
    %v2074 = vpop.f32.mrf.mxu0
    %v2075 = vadd.f32 %v1750, %v2074
    %v2076 = vpop.f32.mrf.mxu0
    %v2077 = vadd.f32 %v1750, %v2076
    %2078 = vmatmul.bf16.gmra.mxu0 %v1903
    %v2079 = vpop.f32.mrf.mxu0
    %v2080 = vadd.f32 %v1750, %v2079
    %v2081 = vpop.f32.mrf.mxu0
    %v2082 = vadd.f32 %v1750, %v2081
    %2083 = vmatmul.bf16.gmra.mxu0 %v1906
    %v2084 = vpop.f32.mrf.mxu0
    %v2085 = vadd.f32 %v1750, %v2084
    %v2086 = vpop.f32.mrf.mxu0
    %v2087 = vadd.f32 %v1750, %v2086
    %2088 = vdwg.mxu0
    %2089 = vmatpush.bf16.msra.mxu0 0
    %2090 = vmatpush.bf16.msra.mxu0 0
    %2091 = vmatpush.bf16.msra.mxu0 0
    %2092 = vmatpush.bf16.msra.mxu0 0
    %2093 = vmatpush.bf16.msra.mxu0 %v1915
    %2094 = vmatpush.bf16.msra.mxu0 %v1798
    %2095 = vmatpush.bf16.msra.mxu0 %v1795
    %2096 = vmatpush.bf16.msra.mxu0 %v1792
    %2097 = vmatmul.bf16.gmra.mxu0 %v1813
    %v2098 = vpop.f32.mrf.mxu0
    %v2099 = vadd.f32 %v1751, %v2098
    %v2100 = vpop.f32.mrf.mxu0
    %v2101 = vadd.f32 %v1751, %v2100
    %2102 = vmatmul.bf16.gmra.mxu0 %v1816
    %v2103 = vpop.f32.mrf.mxu0
    %v2104 = vadd.f32 %v1751, %v2103
    %v2105 = vpop.f32.mrf.mxu0
    %v2106 = vadd.f32 %v1751, %v2105
    %2107 = vmatmul.bf16.gmra.mxu0 %v1819
    %v2108 = vpop.f32.mrf.mxu0
    %v2109 = vadd.f32 %v1751, %v2108
    %v2110 = vpop.f32.mrf.mxu0
    %v2111 = vadd.f32 %v1751, %v2110
    %2112 = vmatmul.bf16.gmra.mxu0 %v1822
    %v2113 = vpop.f32.mrf.mxu0
    %v2114 = vadd.f32 %v1751, %v2113
    %v2115 = vpop.f32.mrf.mxu0
    %v2116 = vadd.f32 %v1751, %v2115
    %2117 = vmatmul.bf16.gmra.mxu0 %v1825
    %v2118 = vpop.f32.mrf.mxu0
    %v2119 = vadd.f32 %v1751, %v2118
    %v2120 = vpop.f32.mrf.mxu0
    %v2121 = vadd.f32 %v1751, %v2120
    %2122 = vmatmul.bf16.gmra.mxu0 %v1828
    %v2123 = vpop.f32.mrf.mxu0
    %v2124 = vadd.f32 %v1751, %v2123
    %v2125 = vpop.f32.mrf.mxu0
    %v2126 = vadd.f32 %v1751, %v2125
    %2127 = vmatmul.bf16.gmra.mxu0 %v1831
    %v2128 = vpop.f32.mrf.mxu0
    %v2129 = vadd.f32 %v1751, %v2128
    %v2130 = vpop.f32.mrf.mxu0
    %v2131 = vadd.f32 %v1751, %v2130
    %2132 = vmatmul.bf16.gmra.mxu0 %v1834
    %v2133 = vpop.f32.mrf.mxu0
    %v2134 = vadd.f32 %v1751, %v2133
    %v2135 = vpop.f32.mrf.mxu0
    %v2136 = vadd.f32 %v1751, %v2135
    %2137 = vmatmul.bf16.gmra.mxu0 %v1837
    %v2138 = vpop.f32.mrf.mxu0
    %v2139 = vadd.f32 %v1751, %v2138
    %v2140 = vpop.f32.mrf.mxu0
    %v2141 = vadd.f32 %v1751, %v2140
    %2142 = vmatmul.bf16.gmra.mxu0 %v1840
    %v2143 = vpop.f32.mrf.mxu0
    %v2144 = vadd.f32 %v1751, %v2143
    %v2145 = vpop.f32.mrf.mxu0
    %v2146 = vadd.f32 %v1751, %v2145
    %2147 = vmatmul.bf16.gmra.mxu0 %v1843
    %v2148 = vpop.f32.mrf.mxu0
    %v2149 = vadd.f32 %v1751, %v2148
    %v2150 = vpop.f32.mrf.mxu0
    %v2151 = vadd.f32 %v1751, %v2150
    %2152 = vmatmul.bf16.gmra.mxu0 %v1846
    %v2153 = vpop.f32.mrf.mxu0
    %v2154 = vadd.f32 %v1751, %v2153
    %v2155 = vpop.f32.mrf.mxu0
    %v2156 = vadd.f32 %v1751, %v2155
    %2157 = vmatmul.bf16.gmra.mxu0 %v1849
    %v2158 = vpop.f32.mrf.mxu0
    %v2159 = vadd.f32 %v1751, %v2158
    %v2160 = vpop.f32.mrf.mxu0
    %v2161 = vadd.f32 %v1751, %v2160
    %2162 = vmatmul.bf16.gmra.mxu0 %v1852
    %v2163 = vpop.f32.mrf.mxu0
    %v2164 = vadd.f32 %v1751, %v2163
    %v2165 = vpop.f32.mrf.mxu0
    %v2166 = vadd.f32 %v1751, %v2165
    %2167 = vmatmul.bf16.gmra.mxu0 %v1855
    %v2168 = vpop.f32.mrf.mxu0
    %v2169 = vadd.f32 %v1751, %v2168
    %v2170 = vpop.f32.mrf.mxu0
    %v2171 = vadd.f32 %v1751, %v2170
    %2172 = vmatmul.bf16.gmra.mxu0 %v1858
    %v2173 = vpop.f32.mrf.mxu0
    %v2174 = vadd.f32 %v1751, %v2173
    %v2175 = vpop.f32.mrf.mxu0
    %v2176 = vadd.f32 %v1751, %v2175
    %2177 = vmatmul.bf16.gmra.mxu0 %v1861
    %v2178 = vpop.f32.mrf.mxu0
    %v2179 = vadd.f32 %v1751, %v2178
    %v2180 = vpop.f32.mrf.mxu0
    %v2181 = vadd.f32 %v1751, %v2180
    %2182 = vmatmul.bf16.gmra.mxu0 %v1864
    %v2183 = vpop.f32.mrf.mxu0
    %v2184 = vadd.f32 %v1751, %v2183
    %v2185 = vpop.f32.mrf.mxu0
    %v2186 = vadd.f32 %v1751, %v2185
    %2187 = vmatmul.bf16.gmra.mxu0 %v1867
    %v2188 = vpop.f32.mrf.mxu0
    %v2189 = vadd.f32 %v1751, %v2188
    %v2190 = vpop.f32.mrf.mxu0
    %v2191 = vadd.f32 %v1751, %v2190
    %2192 = vmatmul.bf16.gmra.mxu0 %v1870
    %v2193 = vpop.f32.mrf.mxu0
    %v2194 = vadd.f32 %v1751, %v2193
    %v2195 = vpop.f32.mrf.mxu0
    %v2196 = vadd.f32 %v1751, %v2195
    %2197 = vmatmul.bf16.gmra.mxu0 %v1873
    %v2198 = vpop.f32.mrf.mxu0
    %v2199 = vadd.f32 %v1751, %v2198
    %v2200 = vpop.f32.mrf.mxu0
    %v2201 = vadd.f32 %v1751, %v2200
    %2202 = vmatmul.bf16.gmra.mxu0 %v1876
    %v2203 = vpop.f32.mrf.mxu0
    %v2204 = vadd.f32 %v1751, %v2203
    %v2205 = vpop.f32.mrf.mxu0
    %v2206 = vadd.f32 %v1751, %v2205
    %2207 = vmatmul.bf16.gmra.mxu0 %v1879
    %v2208 = vpop.f32.mrf.mxu0
    %v2209 = vadd.f32 %v1751, %v2208
    %v2210 = vpop.f32.mrf.mxu0
    %v2211 = vadd.f32 %v1751, %v2210
    %2212 = vmatmul.bf16.gmra.mxu0 %v1882
    %v2213 = vpop.f32.mrf.mxu0
    %v2214 = vadd.f32 %v1751, %v2213
    %v2215 = vpop.f32.mrf.mxu0
    %v2216 = vadd.f32 %v1751, %v2215
    %2217 = vmatmul.bf16.gmra.mxu0 %v1885
    %v2218 = vpop.f32.mrf.mxu0
    %v2219 = vadd.f32 %v1751, %v2218
    %v2220 = vpop.f32.mrf.mxu0
    %v2221 = vadd.f32 %v1751, %v2220
    %2222 = vmatmul.bf16.gmra.mxu0 %v1888
    %v2223 = vpop.f32.mrf.mxu0
    %v2224 = vadd.f32 %v1751, %v2223
    %v2225 = vpop.f32.mrf.mxu0
    %v2226 = vadd.f32 %v1751, %v2225
    %2227 = vmatmul.bf16.gmra.mxu0 %v1891
    %v2228 = vpop.f32.mrf.mxu0
    %v2229 = vadd.f32 %v1751, %v2228
    %v2230 = vpop.f32.mrf.mxu0
    %v2231 = vadd.f32 %v1751, %v2230
    %2232 = vmatmul.bf16.gmra.mxu0 %v1894
    %v2233 = vpop.f32.mrf.mxu0
    %v2234 = vadd.f32 %v1751, %v2233
    %v2235 = vpop.f32.mrf.mxu0
    %v2236 = vadd.f32 %v1751, %v2235
    %2237 = vmatmul.bf16.gmra.mxu0 %v1897
    %v2238 = vpop.f32.mrf.mxu0
    %v2239 = vadd.f32 %v1751, %v2238
    %v2240 = vpop.f32.mrf.mxu0
    %v2241 = vadd.f32 %v1751, %v2240
    %2242 = vmatmul.bf16.gmra.mxu0 %v1900
    %v2243 = vpop.f32.mrf.mxu0
    %v2244 = vadd.f32 %v1751, %v2243
    %v2245 = vpop.f32.mrf.mxu0
    %v2246 = vadd.f32 %v1751, %v2245
    %2247 = vmatmul.bf16.gmra.mxu0 %v1903
    %v2248 = vpop.f32.mrf.mxu0
    %v2249 = vadd.f32 %v1751, %v2248
    %v2250 = vpop.f32.mrf.mxu0
    %v2251 = vadd.f32 %v1751, %v2250
    %2252 = vmatmul.bf16.gmra.mxu0 %v1906
    %v2253 = vpop.f32.mrf.mxu0
    %v2254 = vadd.f32 %v1751, %v2253
    %v2255 = vpop.f32.mrf.mxu0
    %v2256 = vadd.f32 %v1751, %v2255
    %2257 = vdwg.mxu0
    %2258 = vmatpush.bf16.msra.mxu0 0
    %2259 = vmatpush.bf16.msra.mxu0 0
    %2260 = vmatpush.bf16.msra.mxu0 0
    %2261 = vmatpush.bf16.msra.mxu0 0
    %2262 = vmatpush.bf16.msra.mxu0 %v1918
    %2263 = vmatpush.bf16.msra.mxu0 %v1799
    %2264 = vmatpush.bf16.msra.mxu0 %v1796
    %2265 = vmatpush.bf16.msra.mxu0 %v1793
    %2266 = vmatmul.bf16.gmra.mxu0 %v1813
    %v2267 = vpop.f32.mrf.mxu0
    %v2268 = vadd.f32 %v1752, %v2267
    %v2269 = vpop.f32.mrf.mxu0
    %v2270 = vadd.f32 %v1752, %v2269
    %2271 = vmatmul.bf16.gmra.mxu0 %v1816
    %v2272 = vpop.f32.mrf.mxu0
    %v2273 = vadd.f32 %v1752, %v2272
    %v2274 = vpop.f32.mrf.mxu0
    %v2275 = vadd.f32 %v1752, %v2274
    %2276 = vmatmul.bf16.gmra.mxu0 %v1819
    %v2277 = vpop.f32.mrf.mxu0
    %v2278 = vadd.f32 %v1752, %v2277
    %v2279 = vpop.f32.mrf.mxu0
    %v2280 = vadd.f32 %v1752, %v2279
    %2281 = vmatmul.bf16.gmra.mxu0 %v1822
    %v2282 = vpop.f32.mrf.mxu0
    %v2283 = vadd.f32 %v1752, %v2282
    %v2284 = vpop.f32.mrf.mxu0
    %v2285 = vadd.f32 %v1752, %v2284
    %2286 = vmatmul.bf16.gmra.mxu0 %v1825
    %v2287 = vpop.f32.mrf.mxu0
    %v2288 = vadd.f32 %v1752, %v2287
    %v2289 = vpop.f32.mrf.mxu0
    %v2290 = vadd.f32 %v1752, %v2289
    %2291 = vmatmul.bf16.gmra.mxu0 %v1828
    %v2292 = vpop.f32.mrf.mxu0
    %v2293 = vadd.f32 %v1752, %v2292
    %v2294 = vpop.f32.mrf.mxu0
    %v2295 = vadd.f32 %v1752, %v2294
    %2296 = vmatmul.bf16.gmra.mxu0 %v1831
    %v2297 = vpop.f32.mrf.mxu0
    %v2298 = vadd.f32 %v1752, %v2297
    %v2299 = vpop.f32.mrf.mxu0
    %v2300 = vadd.f32 %v1752, %v2299
    %2301 = vmatmul.bf16.gmra.mxu0 %v1834
    %v2302 = vpop.f32.mrf.mxu0
    %v2303 = vadd.f32 %v1752, %v2302
    %v2304 = vpop.f32.mrf.mxu0
    %v2305 = vadd.f32 %v1752, %v2304
    %2306 = vmatmul.bf16.gmra.mxu0 %v1837
    %v2307 = vpop.f32.mrf.mxu0
    %v2308 = vadd.f32 %v1752, %v2307
    %v2309 = vpop.f32.mrf.mxu0
    %v2310 = vadd.f32 %v1752, %v2309
    %2311 = vmatmul.bf16.gmra.mxu0 %v1840
    %v2312 = vpop.f32.mrf.mxu0
    %v2313 = vadd.f32 %v1752, %v2312
    %v2314 = vpop.f32.mrf.mxu0
    %v2315 = vadd.f32 %v1752, %v2314
    %2316 = vmatmul.bf16.gmra.mxu0 %v1843
    %v2317 = vpop.f32.mrf.mxu0
    %v2318 = vadd.f32 %v1752, %v2317
    %v2319 = vpop.f32.mrf.mxu0
    %v2320 = vadd.f32 %v1752, %v2319
    %2321 = vmatmul.bf16.gmra.mxu0 %v1846
    %v2322 = vpop.f32.mrf.mxu0
    %v2323 = vadd.f32 %v1752, %v2322
    %v2324 = vpop.f32.mrf.mxu0
    %v2325 = vadd.f32 %v1752, %v2324
    %2326 = vmatmul.bf16.gmra.mxu0 %v1849
    %v2327 = vpop.f32.mrf.mxu0
    %v2328 = vadd.f32 %v1752, %v2327
    %v2329 = vpop.f32.mrf.mxu0
    %v2330 = vadd.f32 %v1752, %v2329
    %2331 = vmatmul.bf16.gmra.mxu0 %v1852
    %v2332 = vpop.f32.mrf.mxu0
    %v2333 = vadd.f32 %v1752, %v2332
    %v2334 = vpop.f32.mrf.mxu0
    %v2335 = vadd.f32 %v1752, %v2334
    %2336 = vmatmul.bf16.gmra.mxu0 %v1855
    %v2337 = vpop.f32.mrf.mxu0
    %v2338 = vadd.f32 %v1752, %v2337
    %v2339 = vpop.f32.mrf.mxu0
    %v2340 = vadd.f32 %v1752, %v2339
    %2341 = vmatmul.bf16.gmra.mxu0 %v1858
    %v2342 = vpop.f32.mrf.mxu0
    %v2343 = vadd.f32 %v1752, %v2342
    %v2344 = vpop.f32.mrf.mxu0
    %v2345 = vadd.f32 %v1752, %v2344
    %2346 = vmatmul.bf16.gmra.mxu0 %v1861
    %v2347 = vpop.f32.mrf.mxu0
    %v2348 = vadd.f32 %v1752, %v2347
    %v2349 = vpop.f32.mrf.mxu0
    %v2350 = vadd.f32 %v1752, %v2349
    %2351 = vmatmul.bf16.gmra.mxu0 %v1864
    %v2352 = vpop.f32.mrf.mxu0
    %v2353 = vadd.f32 %v1752, %v2352
    %v2354 = vpop.f32.mrf.mxu0
    %v2355 = vadd.f32 %v1752, %v2354
    %2356 = vmatmul.bf16.gmra.mxu0 %v1867
    %v2357 = vpop.f32.mrf.mxu0
    %v2358 = vadd.f32 %v1752, %v2357
    %v2359 = vpop.f32.mrf.mxu0
    %v2360 = vadd.f32 %v1752, %v2359
    %2361 = vmatmul.bf16.gmra.mxu0 %v1870
    %v2362 = vpop.f32.mrf.mxu0
    %v2363 = vadd.f32 %v1752, %v2362
    %v2364 = vpop.f32.mrf.mxu0
    %v2365 = vadd.f32 %v1752, %v2364
    %2366 = vmatmul.bf16.gmra.mxu0 %v1873
    %v2367 = vpop.f32.mrf.mxu0
    %v2368 = vadd.f32 %v1752, %v2367
    %v2369 = vpop.f32.mrf.mxu0
    %v2370 = vadd.f32 %v1752, %v2369
    %2371 = vmatmul.bf16.gmra.mxu0 %v1876
    %v2372 = vpop.f32.mrf.mxu0
    %v2373 = vadd.f32 %v1752, %v2372
    %v2374 = vpop.f32.mrf.mxu0
    %v2375 = vadd.f32 %v1752, %v2374
    %2376 = vmatmul.bf16.gmra.mxu0 %v1879
    %v2377 = vpop.f32.mrf.mxu0
    %v2378 = vadd.f32 %v1752, %v2377
    %v2379 = vpop.f32.mrf.mxu0
    %v2380 = vadd.f32 %v1752, %v2379
    %2381 = vmatmul.bf16.gmra.mxu0 %v1882
    %v2382 = vpop.f32.mrf.mxu0
    %v2383 = vadd.f32 %v1752, %v2382
    %v2384 = vpop.f32.mrf.mxu0
    %v2385 = vadd.f32 %v1752, %v2384
    %2386 = vmatmul.bf16.gmra.mxu0 %v1885
    %v2387 = vpop.f32.mrf.mxu0
    %v2388 = vadd.f32 %v1752, %v2387
    %v2389 = vpop.f32.mrf.mxu0
    %v2390 = vadd.f32 %v1752, %v2389
    %2391 = vmatmul.bf16.gmra.mxu0 %v1888
    %v2392 = vpop.f32.mrf.mxu0
    %v2393 = vadd.f32 %v1752, %v2392
    %v2394 = vpop.f32.mrf.mxu0
    %v2395 = vadd.f32 %v1752, %v2394
    %2396 = vmatmul.bf16.gmra.mxu0 %v1891
    %v2397 = vpop.f32.mrf.mxu0
    %v2398 = vadd.f32 %v1752, %v2397
    %v2399 = vpop.f32.mrf.mxu0
    %v2400 = vadd.f32 %v1752, %v2399
    %2401 = vmatmul.bf16.gmra.mxu0 %v1894
    %v2402 = vpop.f32.mrf.mxu0
    %v2403 = vadd.f32 %v1752, %v2402
    %v2404 = vpop.f32.mrf.mxu0
    %v2405 = vadd.f32 %v1752, %v2404
    %2406 = vmatmul.bf16.gmra.mxu0 %v1897
    %v2407 = vpop.f32.mrf.mxu0
    %v2408 = vadd.f32 %v1752, %v2407
    %v2409 = vpop.f32.mrf.mxu0
    %v2410 = vadd.f32 %v1752, %v2409
    %2411 = vmatmul.bf16.gmra.mxu0 %v1900
    %v2412 = vpop.f32.mrf.mxu0
    %v2413 = vadd.f32 %v1752, %v2412
    %v2414 = vpop.f32.mrf.mxu0
    %v2415 = vadd.f32 %v1752, %v2414
    %2416 = vmatmul.bf16.gmra.mxu0 %v1903
    %v2417 = vpop.f32.mrf.mxu0
    %v2418 = vadd.f32 %v1752, %v2417
    %v2419 = vpop.f32.mrf.mxu0
    %v2420 = vadd.f32 %v1752, %v2419
    %2421 = vmatmul.bf16.gmra.mxu0 %v1906
    %v2422 = vpop.f32.mrf.mxu0
    %v2423 = vadd.f32 %v1752, %v2422
    %v2424 = vpop.f32.mrf.mxu0
    %v2425 = vadd.f32 %v1752, %v2424
    %2426 = vdwg.mxu0
    %v2427 = vpack.c.bf16 %v2099, %v1930
    %v2428 = vpack.c.bf16 %v2268, %v2268
    %v2429 = vpack.c.bf16 %v2101, %v1932
    %v2430 = vpack.c.bf16 %v2270, %v2270
    %v2431 = vpack.c.bf16 %v2104, %v1935
    %v2432 = vpack.c.bf16 %v2273, %v2273
    %v2433 = vpack.c.bf16 %v2106, %v1937
    %v2434 = vpack.c.bf16 %v2275, %v2275
    %v2435 = vpack.c.bf16 %v2109, %v1940
    %v2436 = vpack.c.bf16 %v2278, %v2278
    %v2437 = vpack.c.bf16 %v2111, %v1942
    %v2438 = vpack.c.bf16 %v2280, %v2280
    %v2439 = vpack.c.bf16 %v2114, %v1945
    %v2440 = vpack.c.bf16 %v2283, %v2283
    %v2441 = vpack.c.bf16 %v2116, %v1947
    %v2442 = vpack.c.bf16 %v2285, %v2285
    %v2443 = vpack.c.bf16 %v2119, %v1950
    %v2444 = vpack.c.bf16 %v2288, %v2288
    %v2445 = vpack.c.bf16 %v2121, %v1952
    %v2446 = vpack.c.bf16 %v2290, %v2290
    %v2447 = vpack.c.bf16 %v2124, %v1955
    %v2448 = vpack.c.bf16 %v2293, %v2293
    %v2449 = vpack.c.bf16 %v2126, %v1957
    %v2450 = vpack.c.bf16 %v2295, %v2295
    %v2451 = vpack.c.bf16 %v2129, %v1960
    %v2452 = vpack.c.bf16 %v2298, %v2298
    %v2453 = vpack.c.bf16 %v2131, %v1962
    %v2454 = vpack.c.bf16 %v2300, %v2300
    %v2455 = vpack.c.bf16 %v2134, %v1965
    %v2456 = vpack.c.bf16 %v2303, %v2303
    %v2457 = vpack.c.bf16 %v2136, %v1967
    %v2458 = vpack.c.bf16 %v2305, %v2305
    %v2459 = vpack.c.bf16 %v2139, %v1970
    %v2460 = vpack.c.bf16 %v2308, %v2308
    %v2461 = vpack.c.bf16 %v2141, %v1972
    %v2462 = vpack.c.bf16 %v2310, %v2310
    %v2463 = vpack.c.bf16 %v2144, %v1975
    %v2464 = vpack.c.bf16 %v2313, %v2313
    %v2465 = vpack.c.bf16 %v2146, %v1977
    %v2466 = vpack.c.bf16 %v2315, %v2315
    %v2467 = vpack.c.bf16 %v2149, %v1980
    %v2468 = vpack.c.bf16 %v2318, %v2318
    %v2469 = vpack.c.bf16 %v2151, %v1982
    %v2470 = vpack.c.bf16 %v2320, %v2320
    %v2471 = vpack.c.bf16 %v2154, %v1985
    %v2472 = vpack.c.bf16 %v2323, %v2323
    %v2473 = vpack.c.bf16 %v2156, %v1987
    %v2474 = vpack.c.bf16 %v2325, %v2325
    %v2475 = vpack.c.bf16 %v2159, %v1990
    %v2476 = vpack.c.bf16 %v2328, %v2328
    %v2477 = vpack.c.bf16 %v2161, %v1992
    %v2478 = vpack.c.bf16 %v2330, %v2330
    %v2479 = vpack.c.bf16 %v2164, %v1995
    %v2480 = vpack.c.bf16 %v2333, %v2333
    %v2481 = vpack.c.bf16 %v2166, %v1997
    %v2482 = vpack.c.bf16 %v2335, %v2335
    %v2483 = vpack.c.bf16 %v2169, %v2000
    %v2484 = vpack.c.bf16 %v2338, %v2338
    %v2485 = vpack.c.bf16 %v2171, %v2002
    %v2486 = vpack.c.bf16 %v2340, %v2340
    %v2487 = vpack.c.bf16 %v2174, %v2005
    %v2488 = vpack.c.bf16 %v2343, %v2343
    %v2489 = vpack.c.bf16 %v2176, %v2007
    %v2490 = vpack.c.bf16 %v2345, %v2345
    %v2491 = vpack.c.bf16 %v2179, %v2010
    %v2492 = vpack.c.bf16 %v2348, %v2348
    %v2493 = vpack.c.bf16 %v2181, %v2012
    %v2494 = vpack.c.bf16 %v2350, %v2350
    %v2495 = vpack.c.bf16 %v2184, %v2015
    %v2496 = vpack.c.bf16 %v2353, %v2353
    %v2497 = vpack.c.bf16 %v2186, %v2017
    %v2498 = vpack.c.bf16 %v2355, %v2355
    %v2499 = vpack.c.bf16 %v2189, %v2020
    %v2500 = vpack.c.bf16 %v2358, %v2358
    %v2501 = vpack.c.bf16 %v2191, %v2022
    %v2502 = vpack.c.bf16 %v2360, %v2360
    %v2503 = vpack.c.bf16 %v2194, %v2025
    %v2504 = vpack.c.bf16 %v2363, %v2363
    %v2505 = vpack.c.bf16 %v2196, %v2027
    %v2506 = vpack.c.bf16 %v2365, %v2365
    %v2507 = vpack.c.bf16 %v2199, %v2030
    %v2508 = vpack.c.bf16 %v2368, %v2368
    %v2509 = vpack.c.bf16 %v2201, %v2032
    %v2510 = vpack.c.bf16 %v2370, %v2370
    %v2511 = vpack.c.bf16 %v2204, %v2035
    %v2512 = vpack.c.bf16 %v2373, %v2373
    %v2513 = vpack.c.bf16 %v2206, %v2037
    %v2514 = vpack.c.bf16 %v2375, %v2375
    %v2515 = vpack.c.bf16 %v2209, %v2040
    %v2516 = vpack.c.bf16 %v2378, %v2378
    %v2517 = vpack.c.bf16 %v2211, %v2042
    %v2518 = vpack.c.bf16 %v2380, %v2380
    %v2519 = vpack.c.bf16 %v2214, %v2045
    %v2520 = vpack.c.bf16 %v2383, %v2383
    %v2521 = vpack.c.bf16 %v2216, %v2047
    %v2522 = vpack.c.bf16 %v2385, %v2385
    %v2523 = vpack.c.bf16 %v2219, %v2050
    %v2524 = vpack.c.bf16 %v2388, %v2388
    %v2525 = vpack.c.bf16 %v2221, %v2052
    %v2526 = vpack.c.bf16 %v2390, %v2390
    %v2527 = vpack.c.bf16 %v2224, %v2055
    %v2528 = vpack.c.bf16 %v2393, %v2393
    %v2529 = vpack.c.bf16 %v2226, %v2057
    %v2530 = vpack.c.bf16 %v2395, %v2395
    %v2531 = vpack.c.bf16 %v2229, %v2060
    %v2532 = vpack.c.bf16 %v2398, %v2398
    %v2533 = vpack.c.bf16 %v2231, %v2062
    %v2534 = vpack.c.bf16 %v2400, %v2400
    %v2535 = vpack.c.bf16 %v2234, %v2065
    %v2536 = vpack.c.bf16 %v2403, %v2403
    %v2537 = vpack.c.bf16 %v2236, %v2067
    %v2538 = vpack.c.bf16 %v2405, %v2405
    %v2539 = vpack.c.bf16 %v2239, %v2070
    %v2540 = vpack.c.bf16 %v2408, %v2408
    %v2541 = vpack.c.bf16 %v2241, %v2072
    %v2542 = vpack.c.bf16 %v2410, %v2410
    %v2543 = vpack.c.bf16 %v2244, %v2075
    %v2544 = vpack.c.bf16 %v2413, %v2413
    %v2545 = vpack.c.bf16 %v2246, %v2077
    %v2546 = vpack.c.bf16 %v2415, %v2415
    %v2547 = vpack.c.bf16 %v2249, %v2080
    %v2548 = vpack.c.bf16 %v2418, %v2418
    %v2549 = vpack.c.bf16 %v2251, %v2082
    %v2550 = vpack.c.bf16 %v2420, %v2420
    %v2551 = vpack.c.bf16 %v2254, %v2085
    %v2552 = vpack.c.bf16 %v2423, %v2423
    %v2553 = vpack.c.bf16 %v2256, %v2087
    %v2554 = vpack.c.bf16 %v2425, %v2425
    %2555 = vst [vmem:[#allocation2] sm:$0xff] %v2427
    %2556 = vst [vmem:[#allocation2 + $0x8] sm:$0xf] %v2428
    %2557 = vst [vmem:[#allocation2 + $0xc] sm:$0xff] %v2429
    %2558 = vst [vmem:[#allocation2 + $0x14] sm:$0xf] %v2430
    %2559 = vst [vmem:[#allocation2 + $0x18] sm:$0xff] %v2431
    %2560 = vst [vmem:[#allocation2 + $0x20] sm:$0xf] %v2432
    %2561 = vst [vmem:[#allocation2 + $0x24] sm:$0xff] %v2433
    %2562 = vst [vmem:[#allocation2 + $0x2c] sm:$0xf] %v2434
    %2563 = vst [vmem:[#allocation2 + $0x30] sm:$0xff] %v2435
    %2564 = vst [vmem:[#allocation2 + $0x38] sm:$0xf] %v2436
    %2565 = vst [vmem:[#allocation2 + $0x3c] sm:$0xff] %v2437
    %2566 = vst [vmem:[#allocation2 + $0x44] sm:$0xf] %v2438
    %2567 = vst [vmem:[#allocation2 + $0x48] sm:$0xff] %v2439
    %2568 = vst [vmem:[#allocation2 + $0x50] sm:$0xf] %v2440
    %2569 = vst [vmem:[#allocation2 + $0x54] sm:$0xff] %v2441
    %2570 = vst [vmem:[#allocation2 + $0x5c] sm:$0xf] %v2442
    %2571 = vst [vmem:[#allocation2 + $0x60] sm:$0xff] %v2443
    %2572 = vst [vmem:[#allocation2 + $0x68] sm:$0xf] %v2444
    %2573 = vst [vmem:[#allocation2 + $0x6c] sm:$0xff] %v2445
    %2574 = vst [vmem:[#allocation2 + $0x74] sm:$0xf] %v2446
    %2575 = vst [vmem:[#allocation2 + $0x78] sm:$0xff] %v2447
    %2576 = vst [vmem:[#allocation2 + $0x80] sm:$0xf] %v2448
    %2577 = vst [vmem:[#allocation2 + $0x84] sm:$0xff] %v2449
    %2578 = vst [vmem:[#allocation2 + $0x8c] sm:$0xf] %v2450
    %2579 = vst [vmem:[#allocation2 + $0x90] sm:$0xff] %v2451
    %2580 = vst [vmem:[#allocation2 + $0x98] sm:$0xf] %v2452
    %2581 = vst [vmem:[#allocation2 + $0x9c] sm:$0xff] %v2453
    %2582 = vst [vmem:[#allocation2 + $0xa4] sm:$0xf] %v2454
    %2583 = vst [vmem:[#allocation2 + $0xa8] sm:$0xff] %v2455
    %2584 = vst [vmem:[#allocation2 + $0xb0] sm:$0xf] %v2456
    %2585 = vst [vmem:[#allocation2 + $0xb4] sm:$0xff] %v2457
    %2586 = vst [vmem:[#allocation2 + $0xbc] sm:$0xf] %v2458
    %2587 = vst [vmem:[#allocation2 + $0xc0] sm:$0xff] %v2459
    %2588 = vst [vmem:[#allocation2 + $0xc8] sm:$0xf] %v2460
    %2589 = vst [vmem:[#allocation2 + $0xcc] sm:$0xff] %v2461
    %2590 = vst [vmem:[#allocation2 + $0xd4] sm:$0xf] %v2462
    %2591 = vst [vmem:[#allocation2 + $0xd8] sm:$0xff] %v2463
    %2592 = vst [vmem:[#allocation2 + $0xe0] sm:$0xf] %v2464
    %2593 = vst [vmem:[#allocation2 + $0xe4] sm:$0xff] %v2465
    %2594 = vst [vmem:[#allocation2 + $0xec] sm:$0xf] %v2466
    %2595 = vst [vmem:[#allocation2 + $0xf0] sm:$0xff] %v2467
    %2596 = vst [vmem:[#allocation2 + $0xf8] sm:$0xf] %v2468
    %2597 = vst [vmem:[#allocation2 + $0xfc] sm:$0xff] %v2469
    %2598 = vst [vmem:[#allocation2 + $0x104] sm:$0xf] %v2470
    %2599 = vst [vmem:[#allocation2 + $0x108] sm:$0xff] %v2471
    %2600 = vst [vmem:[#allocation2 + $0x110] sm:$0xf] %v2472
    %2601 = vst [vmem:[#allocation2 + $0x114] sm:$0xff] %v2473
    %2602 = vst [vmem:[#allocation2 + $0x11c] sm:$0xf] %v2474
    %2603 = vst [vmem:[#allocation2 + $0x120] sm:$0xff] %v2475
    %2604 = vst [vmem:[#allocation2 + $0x128] sm:$0xf] %v2476
    %2605 = vst [vmem:[#allocation2 + $0x12c] sm:$0xff] %v2477
    %2606 = vst [vmem:[#allocation2 + $0x134] sm:$0xf] %v2478
    %2607 = vst [vmem:[#allocation2 + $0x138] sm:$0xff] %v2479
    %2608 = vst [vmem:[#allocation2 + $0x140] sm:$0xf] %v2480
    %2609 = vst [vmem:[#allocation2 + $0x144] sm:$0xff] %v2481
    %2610 = vst [vmem:[#allocation2 + $0x14c] sm:$0xf] %v2482
    %2611 = vst [vmem:[#allocation2 + $0x150] sm:$0xff] %v2483
    %2612 = vst [vmem:[#allocation2 + $0x158] sm:$0xf] %v2484
    %2613 = vst [vmem:[#allocation2 + $0x15c] sm:$0xff] %v2485
    %2614 = vst [vmem:[#allocation2 + $0x164] sm:$0xf] %v2486
    %2615 = vst [vmem:[#allocation2 + $0x168] sm:$0xff] %v2487
    %2616 = vst [vmem:[#allocation2 + $0x170] sm:$0xf] %v2488
    %2617 = vst [vmem:[#allocation2 + $0x174] sm:$0xff] %v2489
    %2618 = vst [vmem:[#allocation2 + $0x17c] sm:$0xf] %v2490
    %2619 = vst [vmem:[#allocation2 + $0x180] sm:$0xff] %v2491
    %2620 = vst [vmem:[#allocation2 + $0x188] sm:$0xf] %v2492
    %2621 = vst [vmem:[#allocation2 + $0x18c] sm:$0xff] %v2493
    %2622 = vst [vmem:[#allocation2 + $0x194] sm:$0xf] %v2494
    %2623 = vst [vmem:[#allocation2 + $0x198] sm:$0xff] %v2495
    %2624 = vst [vmem:[#allocation2 + $0x1a0] sm:$0xf] %v2496
    %2625 = vst [vmem:[#allocation2 + $0x1a4] sm:$0xff] %v2497
    %2626 = vst [vmem:[#allocation2 + $0x1ac] sm:$0xf] %v2498
    %2627 = vst [vmem:[#allocation2 + $0x1b0] sm:$0xff] %v2499
    %2628 = vst [vmem:[#allocation2 + $0x1b8] sm:$0xf] %v2500
    %2629 = vst [vmem:[#allocation2 + $0x1bc] sm:$0xff] %v2501
    %2630 = vst [vmem:[#allocation2 + $0x1c4] sm:$0xf] %v2502
    %2631 = vst [vmem:[#allocation2 + $0x1c8] sm:$0xff] %v2503
    %2632 = vst [vmem:[#allocation2 + $0x1d0] sm:$0xf] %v2504
    %2633 = vst [vmem:[#allocation2 + $0x1d4] sm:$0xff] %v2505
    %2634 = vst [vmem:[#allocation2 + $0x1dc] sm:$0xf] %v2506
    %2635 = vst [vmem:[#allocation2 + $0x1e0] sm:$0xff] %v2507
    %2636 = vst [vmem:[#allocation2 + $0x1e8] sm:$0xf] %v2508
    %2637 = vst [vmem:[#allocation2 + $0x1ec] sm:$0xff] %v2509
    %2638 = vst [vmem:[#allocation2 + $0x1f4] sm:$0xf] %v2510
    %2639 = vst [vmem:[#allocation2 + $0x1f8] sm:$0xff] %v2511
    %2640 = vst [vmem:[#allocation2 + $0x200] sm:$0xf] %v2512
    %2641 = vst [vmem:[#allocation2 + $0x204] sm:$0xff] %v2513
    %2642 = vst [vmem:[#allocation2 + $0x20c] sm:$0xf] %v2514
    %2643 = vst [vmem:[#allocation2 + $0x210] sm:$0xff] %v2515
    %2644 = vst [vmem:[#allocation2 + $0x218] sm:$0xf] %v2516
    %2645 = vst [vmem:[#allocation2 + $0x21c] sm:$0xff] %v2517
    %2646 = vst [vmem:[#allocation2 + $0x224] sm:$0xf] %v2518
    %2647 = vst [vmem:[#allocation2 + $0x228] sm:$0xff] %v2519
    %2648 = vst [vmem:[#allocation2 + $0x230] sm:$0xf] %v2520
    %2649 = vst [vmem:[#allocation2 + $0x234] sm:$0xff] %v2521
    %2650 = vst [vmem:[#allocation2 + $0x23c] sm:$0xf] %v2522
    %2651 = vst [vmem:[#allocation2 + $0x240] sm:$0xff] %v2523
    %2652 = vst [vmem:[#allocation2 + $0x248] sm:$0xf] %v2524
    %2653 = vst [vmem:[#allocation2 + $0x24c] sm:$0xff] %v2525
    %2654 = vst [vmem:[#allocation2 + $0x254] sm:$0xf] %v2526
    %2655 = vst [vmem:[#allocation2 + $0x258] sm:$0xff] %v2527
    %2656 = vst [vmem:[#allocation2 + $0x260] sm:$0xf] %v2528
    %2657 = vst [vmem:[#allocation2 + $0x264] sm:$0xff] %v2529
    %2658 = vst [vmem:[#allocation2 + $0x26c] sm:$0xf] %v2530
    %2659 = vst [vmem:[#allocation2 + $0x270] sm:$0xff] %v2531
    %2660 = vst [vmem:[#allocation2 + $0x278] sm:$0xf] %v2532
    %2661 = vst [vmem:[#allocation2 + $0x27c] sm:$0xff] %v2533
    %2662 = vst [vmem:[#allocation2 + $0x284] sm:$0xf] %v2534
    %2663 = vst [vmem:[#allocation2 + $0x288] sm:$0xff] %v2535
    %2664 = vst [vmem:[#allocation2 + $0x290] sm:$0xf] %v2536
    %2665 = vst [vmem:[#allocation2 + $0x294] sm:$0xff] %v2537
    %2666 = vst [vmem:[#allocation2 + $0x29c] sm:$0xf] %v2538
    %2667 = vst [vmem:[#allocation2 + $0x2a0] sm:$0xff] %v2539
    %2668 = vst [vmem:[#allocation2 + $0x2a8] sm:$0xf] %v2540
    %2669 = vst [vmem:[#allocation2 + $0x2ac] sm:$0xff] %v2541
    %2670 = vst [vmem:[#allocation2 + $0x2b4] sm:$0xf] %v2542
    %2671 = vst [vmem:[#allocation2 + $0x2b8] sm:$0xff] %v2543
    %2672 = vst [vmem:[#allocation2 + $0x2c0] sm:$0xf] %v2544
    %2673 = vst [vmem:[#allocation2 + $0x2c4] sm:$0xff] %v2545
    %2674 = vst [vmem:[#allocation2 + $0x2cc] sm:$0xf] %v2546
    %2675 = vst [vmem:[#allocation2 + $0x2d0] sm:$0xff] %v2547
    %2676 = vst [vmem:[#allocation2 + $0x2d8] sm:$0xf] %v2548
    %2677 = vst [vmem:[#allocation2 + $0x2dc] sm:$0xff] %v2549
    %2678 = vst [vmem:[#allocation2 + $0x2e4] sm:$0xf] %v2550
    %2679 = vst [vmem:[#allocation2 + $0x2e8] sm:$0xff] %v2551
    %2680 = vst [vmem:[#allocation2 + $0x2f0] sm:$0xf] %v2552
    %2681 = vst [vmem:[#allocation2 + $0x2f4] sm:$0xff] %v2553
    %2682 = vst [vmem:[#allocation2 + $0x2fc] sm:$0xf] %v2554
    // Predicated region
    $region22: #{pallas_linear.1} parent=1 // pred_check
      _
    $region23: #{pallas_linear.1} parent=1 // pred_check_branch
      %2684 = sbr.rel (0) target = $region25
    $region24: #{pallas_linear.1} parent=1 // pred_region
      %2686 = vsyncadd [#allocation3], 0
      %s2687 = sshll.u32 [#allocation2], 4
      %s2688 = int_to_ptr.vmem [resolvable:$true] %s2687
      %s2689 = sshll.u32 %s5, 4
      %s2690 = int_to_ptr.hbm [resolvable:$true] %s2689
      %2695 = dma.vmem_to_hbm [thread:$0]  %s2688, 12288, %s2690, [#allocation3], 192, 192, 12
    $region25: #{pallas_linear.1} parent=1 // pred_fallthru
      _
    // Predicated region
    $region26: #{pallas_linear.1} parent=1 // pred_check
      _
    $region27: #{pallas_linear.1} parent=1 // pred_check_branch
      %2697 = sbr.rel (0) target = $region29
    $region28: #{pallas_linear.1} parent=1 // pred_region
      %2699 = dma.done [#allocation3], 12288
    $region29: #{pallas_linear.1} parent=1 // pred_fallthru
      _
    %2700 = vsyncpa [#allocation3], 1

</llo_original>
